<compile_context>
chip_gen: v7x
topology: tpu7x:2x2x1
jax: 0.10.0
libtpu: 0.0.40
codegen_flags: <defaults>
</compile_context>

<pallas_src>
import jax
import jax.numpy as jnp
from jax.experimental import pallas as pl
from jax.experimental.pallas import tpu as pltpu


def cr_model_kernel(c_ref, r_ref, w1_ref, aw1_ref, b1_ref, w2_ref, aw2_ref, b2_ref,
                    c_out_ref, r_out_ref):
    # ---- CenterRadiusNormalize (f32 elementwise) ----
    inv_std = 1.0 / 0.3081
    c = (c_ref[...] - 0.1307) * inv_std
    r = r_ref[...] * inv_std

    # Matmul input dtype follows the weight dtype (f32 or bf16); accumulate in f32.
    w1 = w1_ref[...]
    mm_dtype = w1.dtype

    # ---- CenterRadiusLinear #1 (|W1| is a precomputed resident input) ----
    c1 = jnp.dot(c.astype(mm_dtype), w1, preferred_element_type=jnp.float32) + b1_ref[...]
    r1 = jnp.dot(r.astype(mm_dtype), aw1_ref[...], preferred_element_type=jnp.float32)

    # ---- CenterRadiusReLU (via interval endpoints) ----
    lo = jnp.maximum(c1 - r1, 0.0)
    hi = jnp.maximum(c1 + r1, 0.0)
    c2 = (lo + hi) * 0.5
    r2 = (hi - lo) * 0.5

    # ---- CenterRadiusLinear #2 ----
    w2 = w2_ref[...]
    c_out_ref[...] = (jnp.dot(c2.astype(mm_dtype), w2,
                              preferred_element_type=jnp.float32) + b2_ref[...])
    r_out_ref[...] = jnp.dot(r2.astype(mm_dtype), aw2_ref[...],
                             preferred_element_type=jnp.float32)


def _round_up(x, m):
    return ((x + m - 1) // m) * m


def _num_tensorcores():
    """Best-effort detection of TensorCores per chip (v7x has 2; v5e/v6e have 1)."""
    try:
        kind = str(getattr(jax.devices()[0], "device_kind", "")).lower()
        if "v7" in kind:
            return 2
    except Exception:
        pass
    return 1


def center_radius_model(center, radius, w1, b1, w2, b2, *,
                        block_b=512, weight_dtype=jnp.bfloat16):
    """center/radius: (B, C, H, W) float32. Returns (center_out, radius_out): (B, OUT)."""
    B = center.shape[0]
    D = center.shape[1] * center.shape[2] * center.shape[3]
    HID = w1.shape[1]
    OUT = w2.shape[1]

    c2d = center.reshape(B, D).astype(jnp.float32)   # matches torch .view(-1, c*h*w)
    r2d = radius.reshape(B, D).astype(jnp.float32)

    # Batch tile: at least 8 sublanes, at most block_b rows.
    tb = min(block_b, _round_up(B, 8))
    # v7x: keep >= 2 grid steps so the "parallel" batch axis feeds both TensorCores.
    n_tc = _num_tensorcores()
    if n_tc > 1 and B >= 16:
        tb = min(tb, _round_up(-(-B // n_tc), 8))
    Bp = _round_up(B, tb)
    if Bp != B:
        pad = Bp - B
        c2d = jnp.pad(c2d, ((0, pad), (0, 0)))
        r2d = jnp.pad(r2d, ((0, pad), (0, 0)))

    # Weights: cast once, take abs of the *rounded* weights so both interval paths
    # see identical values; |W| passed as resident inputs (no per-step abs temp).
    w1c = w1.astype(weight_dtype)
    w2c = w2.astype(weight_dtype)
    aw1 = jnp.abs(w1c)
    aw2 = jnp.abs(w2c)
    b1_2d = b1.reshape(1, HID).astype(jnp.float32)
    b2_2d = b2.reshape(1, OUT).astype(jnp.float32)

    grid = (Bp // tb,)
    c_out, r_out = pl.pallas_call(
        cr_model_kernel,
        out_shape=(jax.ShapeDtypeStruct((Bp, OUT), jnp.float32),
                   jax.ShapeDtypeStruct((Bp, OUT), jnp.float32)),
        grid_spec=pltpu.PrefetchScalarGridSpec(
            num_scalar_prefetch=0,
            grid=grid,
            in_specs=[
                pl.BlockSpec((tb, D), lambda i: (i, 0)),     # center rows (tiled)
                pl.BlockSpec((tb, D), lambda i: (i, 0)),     # radius rows (tiled)
                pl.BlockSpec((D, HID), lambda i: (0, 0)),    # w1:   VMEM-resident
                pl.BlockSpec((D, HID), lambda i: (0, 0)),    # |w1|: VMEM-resident
                pl.BlockSpec((1, HID), lambda i: (0, 0)),    # b1:   VMEM-resident
                pl.BlockSpec((HID, OUT), lambda i: (0, 0)),  # w2:   VMEM-resident
                pl.BlockSpec((HID, OUT), lambda i: (0, 0)),  # |w2|: VMEM-resident
                pl.BlockSpec((1, OUT), lambda i: (0, 0)),    # b2:   VMEM-resident
            ],
            out_specs=(
                pl.BlockSpec((tb, OUT), lambda i: (i, 0)),
                pl.BlockSpec((tb, OUT), lambda i: (i, 0)),
            ),
        ),
        compiler_params=pltpu.CompilerParams(
            dimension_semantics=("parallel",),          # megacore split on v7x
            vmem_limit_bytes=48 * 1024 * 1024,
        ),
    )(c2d, r2d, w1c, aw1, b1_2d, w2c, aw2, b2_2d)

    if Bp != B:
        c_out = c_out[:B]
        r_out = r_out[:B]
    return c_out, r_out


def _reference(center, radius, w1, b1, w2, b2):
    B = center.shape[0]
    c = center.reshape(B, -1)
    r = radius.reshape(B, -1)
    c = (c - 0.1307) / 0.3081
    r = r / 0.3081
    c = c @ w1 + b1
    r = r @ jnp.abs(w1)
    lo = jnp.maximum(c - r, 0.0)
    hi = jnp.maximum(c + r, 0.0)
    c, r = (lo + hi) / 2, (hi - lo) / 2
    c = c @ w2 + b2
    r = r @ jnp.abs(w2)
    return c, r


if __name__ == "__main__":
    C, Himg, Wimg = 4, 16, 16
    D = C * Himg * Wimg            # 1024
    HID, OUT = 256, 128

    key = jax.random.PRNGKey(0)
    k_x, k_r, k_w1, k_b1, k_w2, k_b2, k_x2, k_r2 = jax.random.split(key, 8)

    # Deterministic synthetic parameters (W stored as weight.T -> (in, out)).
    w1 = 0.02 * jax.random.normal(k_w1, (D, HID), dtype=jnp.float32)
    b1 = 0.1 * jax.random.normal(k_b1, (HID,), dtype=jnp.float32)
    w2 = 0.05 * jax.random.normal(k_w2, (HID, OUT), dtype=jnp.float32)
    b2 = 0.1 * jax.random.normal(k_b2, (OUT,), dtype=jnp.float32)

    fwd = jax.jit(center_radius_model, static_argnames=("block_b", "weight_dtype"))

    # ---- Run 1: spec-sized small batch, f32 weights, exact check ----
    B1 = 2
    x_center = jax.random.normal(k_x, (B1, C, Himg, Wimg), dtype=jnp.float32)
    x_radius = 0.05 * jnp.abs(jax.random.normal(k_r, (B1, C, Himg, Wimg), dtype=jnp.float32))

    c_out, r_out = fwd(x_center, x_radius, w1, b1, w2, b2, weight_dtype=jnp.float32)
    jax.block_until_ready((c_out, r_out))

    c_ref, r_ref = _reference(x_center, x_radius, w1, b1, w2, b2)
    assert c_out.shape == (B1, OUT) and r_out.shape == (B1, OUT)
    assert jnp.allclose(c_out, c_ref, atol=1e-4, rtol=1e-4)
    assert jnp.allclose(r_out, r_ref, atol=1e-4, rtol=1e-4)
    assert bool(jnp.all(r_out >= -1e-6))   # radii stay non-negative

    # ---- Run 2: larger batch exercising the grid (512-row tiles, padding) + bf16 weights ----
    B2 = 1200
    x_center2 = jax.random.normal(k_x2, (B2, C, Himg, Wimg), dtype=jnp.float32)
    x_radius2 = 0.05 * jnp.abs(jax.random.normal(k_r2, (B2, C, Himg, Wimg), dtype=jnp.float32))

    c_out2, r_out2 = fwd(x_center2, x_radius2, w1, b1, w2, b2)   # defaults: block_b=512, bf16
    jax.block_until_ready((c_out2, r_out2))

    c_ref2, r_ref2 = _reference(x_center2, x_radius2, w1, b1, w2, b2)
    assert c_out2.shape == (B2, OUT) and r_out2.shape == (B2, OUT)
    # bf16 weight/activation rounding in the matmuls -> loose tolerance vs the f32 reference.
    assert jnp.allclose(c_out2, c_ref2, atol=5e-2, rtol=5e-2)
    assert jnp.allclose(r_out2, r_ref2, atol=5e-2, rtol=5e-2)
    assert bool(jnp.all(r_out2 >= -1e-6))

    print("KERNEL_OK")
</pallas_src>

<mosaic_0001>
module attributes {stable_mosaic.version = 11 : i64} {
  func.func @cr_model_kernel(%arg0: i32, %arg1: memref<8x1024xf32, #tpu.memory_space<vmem>>, %arg2: memref<8x1024xf32, #tpu.memory_space<vmem>>, %arg3: memref<1024x256xf32, #tpu.memory_space<vmem>>, %arg4: memref<1024x256xf32, #tpu.memory_space<vmem>>, %arg5: memref<1x256xf32, #tpu.memory_space<vmem>>, %arg6: memref<256x128xf32, #tpu.memory_space<vmem>>, %arg7: memref<256x128xf32, #tpu.memory_space<vmem>>, %arg8: memref<1x128xf32, #tpu.memory_space<vmem>>, %arg9: memref<8x128xf32, #tpu.memory_space<vmem>>, %arg10: memref<8x128xf32, #tpu.memory_space<vmem>>) attributes {dimension_semantics = [#tpu.dimension_semantics<parallel>], iteration_bounds = array<i64: 1>, scalar_prefetch = 0 : i64, scratch_operands = 0 : i64, tpu.core_type = #tpu.core_type<tc>, window_params = [{transform_indices = @transform_0, window_bounds = array<i64: 8, 1024>}, {transform_indices = @transform_1, window_bounds = array<i64: 8, 1024>}, {pipeline_mode = #tpu.pipeline_mode<synchronous>, transform_indices = @transform_2, window_bounds = array<i64: 1024, 256>}, {pipeline_mode = #tpu.pipeline_mode<synchronous>, transform_indices = @transform_3, window_bounds = array<i64: 1024, 256>}, {pipeline_mode = #tpu.pipeline_mode<synchronous>, transform_indices = @transform_4, window_bounds = array<i64: 1, 256>}, {pipeline_mode = #tpu.pipeline_mode<synchronous>, transform_indices = @transform_5, window_bounds = array<i64: 256, 128>}, {pipeline_mode = #tpu.pipeline_mode<synchronous>, transform_indices = @transform_6, window_bounds = array<i64: 256, 128>}, {pipeline_mode = #tpu.pipeline_mode<synchronous>, transform_indices = @transform_7, window_bounds = array<i64: 1, 128>}, {transform_indices = @transform_8, window_bounds = array<i64: 8, 128>}, {transform_indices = @transform_9, window_bounds = array<i64: 8, 128>}]} {
    %c0 = arith.constant 0 : index
    %c0_0 = arith.constant 0 : index
    %0 = vector.load %arg1[%c0, %c0_0] : memref<8x1024xf32, #tpu.memory_space<vmem>>, vector<8x1024xf32>
    %cst = arith.constant 1.307000e-01 : f32
    %1 = vector.broadcast %cst : f32 to vector<8x1024xf32>
    %2 = arith.subf %0, %1 : vector<8x1024xf32>
    %cst_1 = arith.constant 3.24569941 : f32
    %3 = vector.broadcast %cst_1 : f32 to vector<8x1024xf32>
    %4 = arith.mulf %2, %3 : vector<8x1024xf32>
    %c0_2 = arith.constant 0 : index
    %c0_3 = arith.constant 0 : index
    %5 = vector.load %arg2[%c0_2, %c0_3] : memref<8x1024xf32, #tpu.memory_space<vmem>>, vector<8x1024xf32>
    %cst_4 = arith.constant 3.24569941 : f32
    %6 = vector.broadcast %cst_4 : f32 to vector<8x1024xf32>
    %7 = arith.mulf %5, %6 : vector<8x1024xf32>
    %c0_5 = arith.constant 0 : index
    %c0_6 = arith.constant 0 : index
    %8 = vector.load %arg3[%c0_5, %c0_6] : memref<1024x256xf32, #tpu.memory_space<vmem>>, vector<1024x256xf32>
    %cst_7 = arith.constant dense<0.000000e+00> : vector<8x256xf32>
    %9 = tpu.matmul %4, %8, %cst_7 {dimension_numbers = #tpu.dot_dimension_numbers<[1], [0], [0], [1], [0, 0, 1, 1], [], []>} : vector<8x1024xf32>, vector<1024x256xf32>, vector<8x256xf32> -> vector<8x256xf32>
    %c0_8 = arith.constant 0 : index
    %c0_9 = arith.constant 0 : index
    %10 = vector.load %arg5[%c0_8, %c0_9] : memref<1x256xf32, #tpu.memory_space<vmem>>, vector<1x256xf32>
    %11 = vector.broadcast %10 : vector<1x256xf32> to vector<8x256xf32>
    %12 = arith.addf %9, %11 : vector<8x256xf32>
    %c0_10 = arith.constant 0 : index
    %c0_11 = arith.constant 0 : index
    %13 = vector.load %arg4[%c0_10, %c0_11] : memref<1024x256xf32, #tpu.memory_space<vmem>>, vector<1024x256xf32>
    %cst_12 = arith.constant dense<0.000000e+00> : vector<8x256xf32>
    %14 = tpu.matmul %7, %13, %cst_12 {dimension_numbers = #tpu.dot_dimension_numbers<[1], [0], [0], [1], [0, 0, 1, 1], [], []>} : vector<8x1024xf32>, vector<1024x256xf32>, vector<8x256xf32> -> vector<8x256xf32>
    %15 = arith.subf %12, %14 : vector<8x256xf32>
    %cst_13 = arith.constant 0.000000e+00 : f32
    %16 = vector.broadcast %cst_13 : f32 to vector<8x256xf32>
    %17 = arith.maximumf %15, %16 : vector<8x256xf32>
    %18 = arith.addf %12, %14 : vector<8x256xf32>
    %cst_14 = arith.constant 0.000000e+00 : f32
    %19 = vector.broadcast %cst_14 : f32 to vector<8x256xf32>
    %20 = arith.maximumf %18, %19 : vector<8x256xf32>
    %21 = arith.addf %17, %20 : vector<8x256xf32>
    %cst_15 = arith.constant 5.000000e-01 : f32
    %22 = vector.broadcast %cst_15 : f32 to vector<8x256xf32>
    %23 = arith.mulf %21, %22 : vector<8x256xf32>
    %24 = arith.subf %20, %17 : vector<8x256xf32>
    %cst_16 = arith.constant 5.000000e-01 : f32
    %25 = vector.broadcast %cst_16 : f32 to vector<8x256xf32>
    %26 = arith.mulf %24, %25 : vector<8x256xf32>
    %c0_17 = arith.constant 0 : index
    %c0_18 = arith.constant 0 : index
    %27 = vector.load %arg6[%c0_17, %c0_18] : memref<256x128xf32, #tpu.memory_space<vmem>>, vector<256x128xf32>
    %cst_19 = arith.constant dense<0.000000e+00> : vector<8x128xf32>
    %28 = tpu.matmul %23, %27, %cst_19 {dimension_numbers = #tpu.dot_dimension_numbers<[1], [0], [0], [1], [0, 0, 1, 1], [], []>} : vector<8x256xf32>, vector<256x128xf32>, vector<8x128xf32> -> vector<8x128xf32>
    %c0_20 = arith.constant 0 : index
    %c0_21 = arith.constant 0 : index
    %29 = vector.load %arg8[%c0_20, %c0_21] : memref<1x128xf32, #tpu.memory_space<vmem>>, vector<1x128xf32>
    %30 = vector.broadcast %29 : vector<1x128xf32> to vector<8x128xf32>
    %31 = arith.addf %28, %30 : vector<8x128xf32>
    %c0_22 = arith.constant 0 : index
    %c0_23 = arith.constant 0 : index
    %32 = vector.load %arg9[%c0_22, %c0_23] : memref<8x128xf32, #tpu.memory_space<vmem>>, vector<8x128xf32>
    tpu.vector_store %arg9[%c0_22, %c0_23], %31 {strides = array<i32>} : memref<8x128xf32, #tpu.memory_space<vmem>>, vector<8x128xf32>,
    %c0_24 = arith.constant 0 : index
    %c0_25 = arith.constant 0 : index
    %33 = vector.load %arg7[%c0_24, %c0_25] : memref<256x128xf32, #tpu.memory_space<vmem>>, vector<256x128xf32>
    %cst_26 = arith.constant dense<0.000000e+00> : vector<8x128xf32>
    %34 = tpu.matmul %26, %33, %cst_26 {dimension_numbers = #tpu.dot_dimension_numbers<[1], [0], [0], [1], [0, 0, 1, 1], [], []>} : vector<8x256xf32>, vector<256x128xf32>, vector<8x128xf32> -> vector<8x128xf32>
    %c0_27 = arith.constant 0 : index
    %c0_28 = arith.constant 0 : index
    %35 = vector.load %arg10[%c0_27, %c0_28] : memref<8x128xf32, #tpu.memory_space<vmem>>, vector<8x128xf32>
    tpu.vector_store %arg10[%c0_27, %c0_28], %34 {strides = array<i32>} : memref<8x128xf32, #tpu.memory_space<vmem>>, vector<8x128xf32>,
    return
  }
  func.func @transform_0(%arg0: i32) -> (i32, i32) {
    %c0_i32 = arith.constant 0 : i32
    %c0_i32_0 = arith.constant 0 : i32
    return %arg0, %c0_i32 : i32, i32
  }
  func.func @transform_1(%arg0: i32) -> (i32, i32) {
    %c0_i32 = arith.constant 0 : i32
    %c0_i32_0 = arith.constant 0 : i32
    return %arg0, %c0_i32 : i32, i32
  }
  func.func @transform_2(%arg0: i32) -> (i32, i32) {
    %c0_i32 = arith.constant 0 : i32
    %c0_i32_0 = arith.constant 0 : i32
    %c0_i32_1 = arith.constant 0 : i32
    return %c0_i32, %c0_i32_0 : i32, i32
  }
  func.func @transform_3(%arg0: i32) -> (i32, i32) {
    %c0_i32 = arith.constant 0 : i32
    %c0_i32_0 = arith.constant 0 : i32
    %c0_i32_1 = arith.constant 0 : i32
    return %c0_i32, %c0_i32_0 : i32, i32
  }
  func.func @transform_4(%arg0: i32) -> (i32, i32) {
    %c0_i32 = arith.constant 0 : i32
    %c0_i32_0 = arith.constant 0 : i32
    %c0_i32_1 = arith.constant 0 : i32
    return %c0_i32, %c0_i32_0 : i32, i32
  }
  func.func @transform_5(%arg0: i32) -> (i32, i32) {
    %c0_i32 = arith.constant 0 : i32
    %c0_i32_0 = arith.constant 0 : i32
    %c0_i32_1 = arith.constant 0 : i32
    return %c0_i32, %c0_i32_0 : i32, i32
  }
  func.func @transform_6(%arg0: i32) -> (i32, i32) {
    %c0_i32 = arith.constant 0 : i32
    %c0_i32_0 = arith.constant 0 : i32
    %c0_i32_1 = arith.constant 0 : i32
    return %c0_i32, %c0_i32_0 : i32, i32
  }
  func.func @transform_7(%arg0: i32) -> (i32, i32) {
    %c0_i32 = arith.constant 0 : i32
    %c0_i32_0 = arith.constant 0 : i32
    %c0_i32_1 = arith.constant 0 : i32
    return %c0_i32, %c0_i32_0 : i32, i32
  }
  func.func @transform_8(%arg0: i32) -> (i32, i32) {
    %c0_i32 = arith.constant 0 : i32
    %c0_i32_0 = arith.constant 0 : i32
    return %arg0, %c0_i32 : i32, i32
  }
  func.func @transform_9(%arg0: i32) -> (i32, i32) {
    %c0_i32 = arith.constant 0 : i32
    %c0_i32_0 = arith.constant 0 : i32
    return %arg0, %c0_i32 : i32, i32
  }
}

</mosaic_0001>

<llo_original>
// kernel: center_radius_model.1
$region0: #{center_radius_model.1}
  #allocation0 [shape = 'u32[]', space=smem, size = 0x4, offset = 0x4, fixed_abs, tag = 'smem constant byte address 0x4 - core index']
  #allocation1 [shape = 'u32[144,128]{1,0:T(1,128)}', space=vmem, size = 0x12000, scoped, tag = 'internal scratch']
  %s0 = inlined_call_operand.vmem [shape: f32[8,1024], index: 0, kind: input, shape index: {}]
  %s1 = inlined_call_operand.vmem [shape: f32[8,1024], index: 1, kind: input, shape index: {}]
  %s2 = inlined_call_operand.vmem [shape: f32[1024,256], index: 2, kind: input, shape index: {}]
  %s3 = inlined_call_operand.vmem [shape: f32[1024,256], index: 3, kind: input, shape index: {}]
  %s4 = inlined_call_operand.vmem [shape: f32[1,256], index: 4, kind: input, shape index: {}]
  %s5 = inlined_call_operand.vmem [shape: f32[256,128], index: 5, kind: input, shape index: {}]
  %s6 = inlined_call_operand.vmem [shape: f32[256,128], index: 6, kind: input, shape index: {}]
  %s7 = inlined_call_operand.vmem [shape: f32[1,128], index: 7, kind: input, shape index: {}]
  %s8 = inlined_call_operand.vmem [shape: f32[8,128], index: 8, kind: output, shape index: {0}]
  %s9 = inlined_call_operand.vmem [shape: f32[8,128], index: 9, kind: output, shape index: {1}]
  %10 = xla_tuple %s8, %s9
  %s11 = sld [smem:[#allocation0]]
  $region50: #{center_radius_model.1} parent=0
    _
  %s13 = ssub.s32 1, %s11
  %s14 = scalar_select 0, %s13, %s11
  // Predicated region
  $region2: #{center_radius_model.1} parent=0 // pred_check
    _
  $region3: #{center_radius_model.1} parent=0 // pred_check_branch
    %16 = sbr.rel (0) target = $region5
  $region4: #{center_radius_model.1} parent=0 // pred_region
    _
  $region5: #{center_radius_model.1} parent=0 // pred_fallthru
    _
  // Predicated region
  $region6: #{center_radius_model.1} parent=0 // pred_check
    _
  $region7: #{center_radius_model.1} parent=0 // pred_check_branch
    %18 = sbr.rel (0) target = $region9
  $region8: #{center_radius_model.1} parent=0 // pred_region
    _
  $region9: #{center_radius_model.1} parent=0 // pred_fallthru
    _
  // Predicated region
  $region10: #{center_radius_model.1} parent=0 // pred_check
    _
  $region11: #{center_radius_model.1} parent=0 // pred_check_branch
    %20 = sbr.rel (0) target = $region13
  $region12: #{center_radius_model.1} parent=0 // pred_region
    _
  $region13: #{center_radius_model.1} parent=0 // pred_fallthru
    _
  // Predicated region
  $region14: #{center_radius_model.1} parent=0 // pred_check
    _
  $region15: #{center_radius_model.1} parent=0 // pred_check_branch
    %22 = sbr.rel (0) target = $region17
  $region16: #{center_radius_model.1} parent=0 // pred_region
    _
  $region17: #{center_radius_model.1} parent=0 // pred_fallthru
    _
  // Predicated region
  $region18: #{center_radius_model.1} parent=0 // pred_check
    _
  $region19: #{center_radius_model.1} parent=0 // pred_check_branch
    %24 = sbr.rel (0) target = $region21
  $region20: #{center_radius_model.1} parent=0 // pred_region
    _
  $region21: #{center_radius_model.1} parent=0 // pred_fallthru
    _
  // Predicated region
  $region22: #{center_radius_model.1} parent=0 // pred_check
    _
  $region23: #{center_radius_model.1} parent=0 // pred_check_branch
    %26 = sbr.rel (0) target = $region25
  $region24: #{center_radius_model.1} parent=0 // pred_region
    _
  $region25: #{center_radius_model.1} parent=0 // pred_fallthru
    _
  // Predicated region
  $region26: #{center_radius_model.1} parent=0 // pred_check
    _
  $region27: #{center_radius_model.1} parent=0 // pred_check_branch
    %28 = sbr.rel (0) target = $region29
  $region28: #{center_radius_model.1} parent=0 // pred_region
    _
  $region29: #{center_radius_model.1} parent=0 // pred_fallthru
    _
  // Predicated region
  $region30: #{center_radius_model.1} parent=0 // pred_check
    _
  $region31: #{center_radius_model.1} parent=0 // pred_check_branch
    %30 = sbr.rel (0) target = $region33
  $region32: #{center_radius_model.1} parent=0 // pred_region
    _
  $region33: #{center_radius_model.1} parent=0 // pred_fallthru
    _
  %v31 = vld [vmem:[%s0] sm:$0xff]
  %v32 = vld [vmem:[%s0 + $0x8] sm:$0xff]
  %v33 = vld [vmem:[%s0 + $0x10] sm:$0xff]
  %v34 = vld [vmem:[%s0 + $0x18] sm:$0xff]
  %v35 = vld [vmem:[%s0 + $0x20] sm:$0xff]
  %v36 = vld [vmem:[%s0 + $0x28] sm:$0xff]
  %v37 = vld [vmem:[%s0 + $0x30] sm:$0xff]
  %v38 = vld [vmem:[%s0 + $0x38] sm:$0xff]
  %v39 = vsub.f32 %v31, 0.1307
  %v40 = vsub.f32 %v32, 0.1307
  %v41 = vsub.f32 %v33, 0.1307
  %v42 = vsub.f32 %v34, 0.1307
  %v43 = vsub.f32 %v35, 0.1307
  %v44 = vsub.f32 %v36, 0.1307
  %v45 = vsub.f32 %v37, 0.1307
  %v46 = vsub.f32 %v38, 0.1307
  %v47 = vmul.f32 %v39, 3.2456994
  %v48 = vmul.f32 %v40, 3.2456994
  %v49 = vmul.f32 %v41, 3.2456994
  %v50 = vmul.f32 %v42, 3.2456994
  %v51 = vmul.f32 %v43, 3.2456994
  %v52 = vmul.f32 %v44, 3.2456994
  %v53 = vmul.f32 %v45, 3.2456994
  %v54 = vmul.f32 %v46, 3.2456994
  %v55 = vld [vmem:[%s1] sm:$0xff]
  %v56 = vld [vmem:[%s1 + $0x8] sm:$0xff]
  %v57 = vld [vmem:[%s1 + $0x10] sm:$0xff]
  %v58 = vld [vmem:[%s1 + $0x18] sm:$0xff]
  %v59 = vld [vmem:[%s1 + $0x20] sm:$0xff]
  %v60 = vld [vmem:[%s1 + $0x28] sm:$0xff]
  %v61 = vld [vmem:[%s1 + $0x30] sm:$0xff]
  %v62 = vld [vmem:[%s1 + $0x38] sm:$0xff]
  %v63 = vmul.f32 %v55, 3.2456994
  %v64 = vmul.f32 %v56, 3.2456994
  %v65 = vmul.f32 %v57, 3.2456994
  %v66 = vmul.f32 %v58, 3.2456994
  %v67 = vmul.f32 %v59, 3.2456994
  %v68 = vmul.f32 %v60, 3.2456994
  %v69 = vmul.f32 %v61, 3.2456994
  %v70 = vmul.f32 %v62, 3.2456994
  %v71 = vld [vmem:[%s2] sm:$0xff]
  %v72 = vld [vmem:[%s2 + $0x8] sm:$0xff]
  %v73 = vld [vmem:[%s2 + $0x10] sm:$0xff]
  %v74 = vld [vmem:[%s2 + $0x18] sm:$0xff]
  %v75 = vld [vmem:[%s2 + $0x20] sm:$0xff]
  %v76 = vld [vmem:[%s2 + $0x28] sm:$0xff]
  %v77 = vld [vmem:[%s2 + $0x30] sm:$0xff]
  %v78 = vld [vmem:[%s2 + $0x38] sm:$0xff]
  %v79 = vld [vmem:[%s2 + $0x40] sm:$0xff]
  %v80 = vld [vmem:[%s2 + $0x48] sm:$0xff]
  %v81 = vld [vmem:[%s2 + $0x50] sm:$0xff]
  %v82 = vld [vmem:[%s2 + $0x58] sm:$0xff]
  %v83 = vld [vmem:[%s2 + $0x60] sm:$0xff]
  %v84 = vld [vmem:[%s2 + $0x68] sm:$0xff]
  %v85 = vld [vmem:[%s2 + $0x70] sm:$0xff]
  %v86 = vld [vmem:[%s2 + $0x78] sm:$0xff]
  %v87 = vld [vmem:[%s2 + $0x80] sm:$0xff]
  %v88 = vld [vmem:[%s2 + $0x88] sm:$0xff]
  %v89 = vld [vmem:[%s2 + $0x90] sm:$0xff]
  %v90 = vld [vmem:[%s2 + $0x98] sm:$0xff]
  %v91 = vld [vmem:[%s2 + $0xa0] sm:$0xff]
  %v92 = vld [vmem:[%s2 + $0xa8] sm:$0xff]
  %v93 = vld [vmem:[%s2 + $0xb0] sm:$0xff]
  %v94 = vld [vmem:[%s2 + $0xb8] sm:$0xff]
  %v95 = vld [vmem:[%s2 + $0xc0] sm:$0xff]
  %v96 = vld [vmem:[%s2 + $0xc8] sm:$0xff]
  %v97 = vld [vmem:[%s2 + $0xd0] sm:$0xff]
  %v98 = vld [vmem:[%s2 + $0xd8] sm:$0xff]
  %v99 = vld [vmem:[%s2 + $0xe0] sm:$0xff]
  %v100 = vld [vmem:[%s2 + $0xe8] sm:$0xff]
  %v101 = vld [vmem:[%s2 + $0xf0] sm:$0xff]
  %v102 = vld [vmem:[%s2 + $0xf8] sm:$0xff]
  %v103 = vld [vmem:[%s2 + $0x100] sm:$0xff]
  %v104 = vld [vmem:[%s2 + $0x108] sm:$0xff]
  %v105 = vld [vmem:[%s2 + $0x110] sm:$0xff]
  %v106 = vld [vmem:[%s2 + $0x118] sm:$0xff]
  %v107 = vld [vmem:[%s2 + $0x120] sm:$0xff]
  %v108 = vld [vmem:[%s2 + $0x128] sm:$0xff]
  %v109 = vld [vmem:[%s2 + $0x130] sm:$0xff]
  %v110 = vld [vmem:[%s2 + $0x138] sm:$0xff]
  %v111 = vld [vmem:[%s2 + $0x140] sm:$0xff]
  %v112 = vld [vmem:[%s2 + $0x148] sm:$0xff]
  %v113 = vld [vmem:[%s2 + $0x150] sm:$0xff]
  %v114 = vld [vmem:[%s2 + $0x158] sm:$0xff]
  %v115 = vld [vmem:[%s2 + $0x160] sm:$0xff]
  %v116 = vld [vmem:[%s2 + $0x168] sm:$0xff]
  %v117 = vld [vmem:[%s2 + $0x170] sm:$0xff]
  %v118 = vld [vmem:[%s2 + $0x178] sm:$0xff]
  %v119 = vld [vmem:[%s2 + $0x180] sm:$0xff]
  %v120 = vld [vmem:[%s2 + $0x188] sm:$0xff]
  %v121 = vld [vmem:[%s2 + $0x190] sm:$0xff]
  %v122 = vld [vmem:[%s2 + $0x198] sm:$0xff]
  %v123 = vld [vmem:[%s2 + $0x1a0] sm:$0xff]
  %v124 = vld [vmem:[%s2 + $0x1a8] sm:$0xff]
  %v125 = vld [vmem:[%s2 + $0x1b0] sm:$0xff]
  %v126 = vld [vmem:[%s2 + $0x1b8] sm:$0xff]
  %v127 = vld [vmem:[%s2 + $0x1c0] sm:$0xff]
  %v128 = vld [vmem:[%s2 + $0x1c8] sm:$0xff]
  %v129 = vld [vmem:[%s2 + $0x1d0] sm:$0xff]
  %v130 = vld [vmem:[%s2 + $0x1d8] sm:$0xff]
  %v131 = vld [vmem:[%s2 + $0x1e0] sm:$0xff]
  %v132 = vld [vmem:[%s2 + $0x1e8] sm:$0xff]
  %v133 = vld [vmem:[%s2 + $0x1f0] sm:$0xff]
  %v134 = vld [vmem:[%s2 + $0x1f8] sm:$0xff]
  %v135 = vld [vmem:[%s2 + $0x200] sm:$0xff]
  %v136 = vld [vmem:[%s2 + $0x208] sm:$0xff]
  %v137 = vld [vmem:[%s2 + $0x210] sm:$0xff]
  %v138 = vld [vmem:[%s2 + $0x218] sm:$0xff]
  %v139 = vld [vmem:[%s2 + $0x220] sm:$0xff]
  %v140 = vld [vmem:[%s2 + $0x228] sm:$0xff]
  %v141 = vld [vmem:[%s2 + $0x230] sm:$0xff]
  %v142 = vld [vmem:[%s2 + $0x238] sm:$0xff]
  %v143 = vld [vmem:[%s2 + $0x240] sm:$0xff]
  %v144 = vld [vmem:[%s2 + $0x248] sm:$0xff]
  %v145 = vld [vmem:[%s2 + $0x250] sm:$0xff]
  %v146 = vld [vmem:[%s2 + $0x258] sm:$0xff]
  %v147 = vld [vmem:[%s2 + $0x260] sm:$0xff]
  %v148 = vld [vmem:[%s2 + $0x268] sm:$0xff]
  %v149 = vld [vmem:[%s2 + $0x270] sm:$0xff]
  %v150 = vld [vmem:[%s2 + $0x278] sm:$0xff]
  %v151 = vld [vmem:[%s2 + $0x280] sm:$0xff]
  %v152 = vld [vmem:[%s2 + $0x288] sm:$0xff]
  %v153 = vld [vmem:[%s2 + $0x290] sm:$0xff]
  %v154 = vld [vmem:[%s2 + $0x298] sm:$0xff]
  %v155 = vld [vmem:[%s2 + $0x2a0] sm:$0xff]
  %v156 = vld [vmem:[%s2 + $0x2a8] sm:$0xff]
  %v157 = vld [vmem:[%s2 + $0x2b0] sm:$0xff]
  %v158 = vld [vmem:[%s2 + $0x2b8] sm:$0xff]
  %v159 = vld [vmem:[%s2 + $0x2c0] sm:$0xff]
  %v160 = vld [vmem:[%s2 + $0x2c8] sm:$0xff]
  %v161 = vld [vmem:[%s2 + $0x2d0] sm:$0xff]
  %v162 = vld [vmem:[%s2 + $0x2d8] sm:$0xff]
  %v163 = vld [vmem:[%s2 + $0x2e0] sm:$0xff]
  %v164 = vld [vmem:[%s2 + $0x2e8] sm:$0xff]
  %v165 = vld [vmem:[%s2 + $0x2f0] sm:$0xff]
  %v166 = vld [vmem:[%s2 + $0x2f8] sm:$0xff]
  %v167 = vld [vmem:[%s2 + $0x300] sm:$0xff]
  %v168 = vld [vmem:[%s2 + $0x308] sm:$0xff]
  %v169 = vld [vmem:[%s2 + $0x310] sm:$0xff]
  %v170 = vld [vmem:[%s2 + $0x318] sm:$0xff]
  %v171 = vld [vmem:[%s2 + $0x320] sm:$0xff]
  %v172 = vld [vmem:[%s2 + $0x328] sm:$0xff]
  %v173 = vld [vmem:[%s2 + $0x330] sm:$0xff]
  %v174 = vld [vmem:[%s2 + $0x338] sm:$0xff]
  %v175 = vld [vmem:[%s2 + $0x340] sm:$0xff]
  %v176 = vld [vmem:[%s2 + $0x348] sm:$0xff]
  %v177 = vld [vmem:[%s2 + $0x350] sm:$0xff]
  %v178 = vld [vmem:[%s2 + $0x358] sm:$0xff]
  %v179 = vld [vmem:[%s2 + $0x360] sm:$0xff]
  %v180 = vld [vmem:[%s2 + $0x368] sm:$0xff]
  %v181 = vld [vmem:[%s2 + $0x370] sm:$0xff]
  %v182 = vld [vmem:[%s2 + $0x378] sm:$0xff]
  %v183 = vld [vmem:[%s2 + $0x380] sm:$0xff]
  %v184 = vld [vmem:[%s2 + $0x388] sm:$0xff]
  %v185 = vld [vmem:[%s2 + $0x390] sm:$0xff]
  %v186 = vld [vmem:[%s2 + $0x398] sm:$0xff]
  %v187 = vld [vmem:[%s2 + $0x3a0] sm:$0xff]
  %v188 = vld [vmem:[%s2 + $0x3a8] sm:$0xff]
  %v189 = vld [vmem:[%s2 + $0x3b0] sm:$0xff]
  %v190 = vld [vmem:[%s2 + $0x3b8] sm:$0xff]
  %v191 = vld [vmem:[%s2 + $0x3c0] sm:$0xff]
  %v192 = vld [vmem:[%s2 + $0x3c8] sm:$0xff]
  %v193 = vld [vmem:[%s2 + $0x3d0] sm:$0xff]
  %v194 = vld [vmem:[%s2 + $0x3d8] sm:$0xff]
  %v195 = vld [vmem:[%s2 + $0x3e0] sm:$0xff]
  %v196 = vld [vmem:[%s2 + $0x3e8] sm:$0xff]
  %v197 = vld [vmem:[%s2 + $0x3f0] sm:$0xff]
  %v198 = vld [vmem:[%s2 + $0x3f8] sm:$0xff]
  %v199 = vld [vmem:[%s2 + $0x400] sm:$0xff]
  %v200 = vld [vmem:[%s2 + $0x408] sm:$0xff]
  %v201 = vld [vmem:[%s2 + $0x410] sm:$0xff]
  %v202 = vld [vmem:[%s2 + $0x418] sm:$0xff]
  %v203 = vld [vmem:[%s2 + $0x420] sm:$0xff]
  %v204 = vld [vmem:[%s2 + $0x428] sm:$0xff]
  %v205 = vld [vmem:[%s2 + $0x430] sm:$0xff]
  %v206 = vld [vmem:[%s2 + $0x438] sm:$0xff]
  %v207 = vld [vmem:[%s2 + $0x440] sm:$0xff]
  %v208 = vld [vmem:[%s2 + $0x448] sm:$0xff]
  %v209 = vld [vmem:[%s2 + $0x450] sm:$0xff]
  %v210 = vld [vmem:[%s2 + $0x458] sm:$0xff]
  %v211 = vld [vmem:[%s2 + $0x460] sm:$0xff]
  %v212 = vld [vmem:[%s2 + $0x468] sm:$0xff]
  %v213 = vld [vmem:[%s2 + $0x470] sm:$0xff]
  %v214 = vld [vmem:[%s2 + $0x478] sm:$0xff]
  %v215 = vld [vmem:[%s2 + $0x480] sm:$0xff]
  %v216 = vld [vmem:[%s2 + $0x488] sm:$0xff]
  %v217 = vld [vmem:[%s2 + $0x490] sm:$0xff]
  %v218 = vld [vmem:[%s2 + $0x498] sm:$0xff]
  %v219 = vld [vmem:[%s2 + $0x4a0] sm:$0xff]
  %v220 = vld [vmem:[%s2 + $0x4a8] sm:$0xff]
  %v221 = vld [vmem:[%s2 + $0x4b0] sm:$0xff]
  %v222 = vld [vmem:[%s2 + $0x4b8] sm:$0xff]
  %v223 = vld [vmem:[%s2 + $0x4c0] sm:$0xff]
  %v224 = vld [vmem:[%s2 + $0x4c8] sm:$0xff]
  %v225 = vld [vmem:[%s2 + $0x4d0] sm:$0xff]
  %v226 = vld [vmem:[%s2 + $0x4d8] sm:$0xff]
  %v227 = vld [vmem:[%s2 + $0x4e0] sm:$0xff]
  %v228 = vld [vmem:[%s2 + $0x4e8] sm:$0xff]
  %v229 = vld [vmem:[%s2 + $0x4f0] sm:$0xff]
  %v230 = vld [vmem:[%s2 + $0x4f8] sm:$0xff]
  %v231 = vld [vmem:[%s2 + $0x500] sm:$0xff]
  %v232 = vld [vmem:[%s2 + $0x508] sm:$0xff]
  %v233 = vld [vmem:[%s2 + $0x510] sm:$0xff]
  %v234 = vld [vmem:[%s2 + $0x518] sm:$0xff]
  %v235 = vld [vmem:[%s2 + $0x520] sm:$0xff]
  %v236 = vld [vmem:[%s2 + $0x528] sm:$0xff]
  %v237 = vld [vmem:[%s2 + $0x530] sm:$0xff]
  %v238 = vld [vmem:[%s2 + $0x538] sm:$0xff]
  %v239 = vld [vmem:[%s2 + $0x540] sm:$0xff]
  %v240 = vld [vmem:[%s2 + $0x548] sm:$0xff]
  %v241 = vld [vmem:[%s2 + $0x550] sm:$0xff]
  %v242 = vld [vmem:[%s2 + $0x558] sm:$0xff]
  %v243 = vld [vmem:[%s2 + $0x560] sm:$0xff]
  %v244 = vld [vmem:[%s2 + $0x568] sm:$0xff]
  %v245 = vld [vmem:[%s2 + $0x570] sm:$0xff]
  %v246 = vld [vmem:[%s2 + $0x578] sm:$0xff]
  %v247 = vld [vmem:[%s2 + $0x580] sm:$0xff]
  %v248 = vld [vmem:[%s2 + $0x588] sm:$0xff]
  %v249 = vld [vmem:[%s2 + $0x590] sm:$0xff]
  %v250 = vld [vmem:[%s2 + $0x598] sm:$0xff]
  %v251 = vld [vmem:[%s2 + $0x5a0] sm:$0xff]
  %v252 = vld [vmem:[%s2 + $0x5a8] sm:$0xff]
  %v253 = vld [vmem:[%s2 + $0x5b0] sm:$0xff]
  %v254 = vld [vmem:[%s2 + $0x5b8] sm:$0xff]
  %v255 = vld [vmem:[%s2 + $0x5c0] sm:$0xff]
  %v256 = vld [vmem:[%s2 + $0x5c8] sm:$0xff]
  %v257 = vld [vmem:[%s2 + $0x5d0] sm:$0xff]
  %v258 = vld [vmem:[%s2 + $0x5d8] sm:$0xff]
  %v259 = vld [vmem:[%s2 + $0x5e0] sm:$0xff]
  %v260 = vld [vmem:[%s2 + $0x5e8] sm:$0xff]
  %v261 = vld [vmem:[%s2 + $0x5f0] sm:$0xff]
  %v262 = vld [vmem:[%s2 + $0x5f8] sm:$0xff]
  %v263 = vld [vmem:[%s2 + $0x600] sm:$0xff]
  %v264 = vld [vmem:[%s2 + $0x608] sm:$0xff]
  %v265 = vld [vmem:[%s2 + $0x610] sm:$0xff]
  %v266 = vld [vmem:[%s2 + $0x618] sm:$0xff]
  %v267 = vld [vmem:[%s2 + $0x620] sm:$0xff]
  %v268 = vld [vmem:[%s2 + $0x628] sm:$0xff]
  %v269 = vld [vmem:[%s2 + $0x630] sm:$0xff]
  %v270 = vld [vmem:[%s2 + $0x638] sm:$0xff]
  %v271 = vld [vmem:[%s2 + $0x640] sm:$0xff]
  %v272 = vld [vmem:[%s2 + $0x648] sm:$0xff]
  %v273 = vld [vmem:[%s2 + $0x650] sm:$0xff]
  %v274 = vld [vmem:[%s2 + $0x658] sm:$0xff]
  %v275 = vld [vmem:[%s2 + $0x660] sm:$0xff]
  %v276 = vld [vmem:[%s2 + $0x668] sm:$0xff]
  %v277 = vld [vmem:[%s2 + $0x670] sm:$0xff]
  %v278 = vld [vmem:[%s2 + $0x678] sm:$0xff]
  %v279 = vld [vmem:[%s2 + $0x680] sm:$0xff]
  %v280 = vld [vmem:[%s2 + $0x688] sm:$0xff]
  %v281 = vld [vmem:[%s2 + $0x690] sm:$0xff]
  %v282 = vld [vmem:[%s2 + $0x698] sm:$0xff]
  %v283 = vld [vmem:[%s2 + $0x6a0] sm:$0xff]
  %v284 = vld [vmem:[%s2 + $0x6a8] sm:$0xff]
  %v285 = vld [vmem:[%s2 + $0x6b0] sm:$0xff]
  %v286 = vld [vmem:[%s2 + $0x6b8] sm:$0xff]
  %v287 = vld [vmem:[%s2 + $0x6c0] sm:$0xff]
  %v288 = vld [vmem:[%s2 + $0x6c8] sm:$0xff]
  %v289 = vld [vmem:[%s2 + $0x6d0] sm:$0xff]
  %v290 = vld [vmem:[%s2 + $0x6d8] sm:$0xff]
  %v291 = vld [vmem:[%s2 + $0x6e0] sm:$0xff]
  %v292 = vld [vmem:[%s2 + $0x6e8] sm:$0xff]
  %v293 = vld [vmem:[%s2 + $0x6f0] sm:$0xff]
  %v294 = vld [vmem:[%s2 + $0x6f8] sm:$0xff]
  %v295 = vld [vmem:[%s2 + $0x700] sm:$0xff]
  %v296 = vld [vmem:[%s2 + $0x708] sm:$0xff]
  %v297 = vld [vmem:[%s2 + $0x710] sm:$0xff]
  %v298 = vld [vmem:[%s2 + $0x718] sm:$0xff]
  %v299 = vld [vmem:[%s2 + $0x720] sm:$0xff]
  %v300 = vld [vmem:[%s2 + $0x728] sm:$0xff]
  %v301 = vld [vmem:[%s2 + $0x730] sm:$0xff]
  %v302 = vld [vmem:[%s2 + $0x738] sm:$0xff]
  %v303 = vld [vmem:[%s2 + $0x740] sm:$0xff]
  %v304 = vld [vmem:[%s2 + $0x748] sm:$0xff]
  %v305 = vld [vmem:[%s2 + $0x750] sm:$0xff]
  %v306 = vld [vmem:[%s2 + $0x758] sm:$0xff]
  %v307 = vld [vmem:[%s2 + $0x760] sm:$0xff]
  %v308 = vld [vmem:[%s2 + $0x768] sm:$0xff]
  %v309 = vld [vmem:[%s2 + $0x770] sm:$0xff]
  %v310 = vld [vmem:[%s2 + $0x778] sm:$0xff]
  %v311 = vld [vmem:[%s2 + $0x780] sm:$0xff]
  %v312 = vld [vmem:[%s2 + $0x788] sm:$0xff]
  %v313 = vld [vmem:[%s2 + $0x790] sm:$0xff]
  %v314 = vld [vmem:[%s2 + $0x798] sm:$0xff]
  %v315 = vld [vmem:[%s2 + $0x7a0] sm:$0xff]
  %v316 = vld [vmem:[%s2 + $0x7a8] sm:$0xff]
  %v317 = vld [vmem:[%s2 + $0x7b0] sm:$0xff]
  %v318 = vld [vmem:[%s2 + $0x7b8] sm:$0xff]
  %v319 = vld [vmem:[%s2 + $0x7c0] sm:$0xff]
  %v320 = vld [vmem:[%s2 + $0x7c8] sm:$0xff]
  %v321 = vld [vmem:[%s2 + $0x7d0] sm:$0xff]
  %v322 = vld [vmem:[%s2 + $0x7d8] sm:$0xff]
  %v323 = vld [vmem:[%s2 + $0x7e0] sm:$0xff]
  %v324 = vld [vmem:[%s2 + $0x7e8] sm:$0xff]
  %v325 = vld [vmem:[%s2 + $0x7f0] sm:$0xff]
  %v326 = vld [vmem:[%s2 + $0x7f8] sm:$0xff]
  %v327 = vld [vmem:[%s4] sm:$0x3]
  %v329 = vlaneseq
  %v330 = vshrl.u32 %v329, 7
  %v331 = vsub.s32 0, %v330
  %v332 = vrot.slane %v327, %v331
  %v333 = vlaneseq
  %v334 = vshrl.u32 %v333, 7
  %v335 = vsub.s32 1, %v334
  %v336 = vrot.slane %v327, %v335
  %339 = vmatprep.subr.mxu0 %v72
  %340 = vmatpush1.msra.mxu0 %v71
  %341 = vmatprep.subr.mxu0 %v74
  %342 = vmatpush1.msra.mxu0 %v73
  %343 = vmatprep.subr.mxu0 %v76
  %344 = vmatpush1.msra.mxu0 %v75
  %345 = vmatprep.subr.mxu0 %v78
  %346 = vmatpush1.msra.mxu0 %v77
  %347 = vmatprep.subr.mxu0 %v80
  %348 = vmatpush1.msra.mxu0 %v79
  %349 = vmatprep.subr.mxu0 %v82
  %350 = vmatpush1.msra.mxu0 %v81
  %351 = vmatprep.subr.mxu0 %v84
  %352 = vmatpush1.msra.mxu0 %v83
  %353 = vmatprep.subr.mxu0 %v86
  %354 = vmatpush1.msra.mxu0 %v85
  %355 = vmatprep.subr.mxu0 %v88
  %356 = vmatpush1.msra.mxu0 %v87
  %357 = vmatprep.subr.mxu0 %v90
  %358 = vmatpush1.msra.mxu0 %v89
  %359 = vmatprep.subr.mxu0 %v92
  %360 = vmatpush1.msra.mxu0 %v91
  %361 = vmatprep.subr.mxu0 %v94
  %362 = vmatpush1.msra.mxu0 %v93
  %363 = vmatprep.subr.mxu0 %v96
  %364 = vmatpush1.msra.mxu0 %v95
  %365 = vmatprep.subr.mxu0 %v98
  %366 = vmatpush1.msra.mxu0 %v97
  %367 = vmatprep.subr.mxu0 %v100
  %368 = vmatpush1.msra.mxu0 %v99
  %369 = vmatprep.subr.mxu0 %v102
  %370 = vmatpush1.msra.mxu0 %v101
  %371 = vmatprep.subr.mxu0 %v104
  %372 = vmatpush1.msra.mxu0 %v103
  %373 = vmatprep.subr.mxu0 %v106
  %374 = vmatpush1.msra.mxu0 %v105
  %375 = vmatprep.subr.mxu0 %v108
  %376 = vmatpush1.msra.mxu0 %v107
  %377 = vmatprep.subr.mxu0 %v110
  %378 = vmatpush1.msra.mxu0 %v109
  %379 = vmatprep.subr.mxu0 %v112
  %380 = vmatpush1.msra.mxu0 %v111
  %381 = vmatprep.subr.mxu0 %v114
  %382 = vmatpush1.msra.mxu0 %v113
  %383 = vmatprep.subr.mxu0 %v116
  %384 = vmatpush1.msra.mxu0 %v115
  %385 = vmatprep.subr.mxu0 %v118
  %386 = vmatpush1.msra.mxu0 %v117
  %387 = vmatprep.subr.mxu0 %v120
  %388 = vmatpush1.msra.mxu0 %v119
  %389 = vmatprep.subr.mxu0 %v122
  %390 = vmatpush1.msra.mxu0 %v121
  %391 = vmatprep.subr.mxu0 %v124
  %392 = vmatpush1.msra.mxu0 %v123
  %393 = vmatprep.subr.mxu0 %v126
  %394 = vmatpush1.msra.mxu0 %v125
  %395 = vmatprep.subr.mxu0 %v128
  %396 = vmatpush1.msra.mxu0 %v127
  %397 = vmatprep.subr.mxu0 %v130
  %398 = vmatpush1.msra.mxu0 %v129
  %399 = vmatprep.subr.mxu0 %v132
  %400 = vmatpush1.msra.mxu0 %v131
  %401 = vmatprep.subr.mxu0 %v134
  %402 = vmatpush1.msra.mxu0 %v133
  %403 = vmatprep.mubr.f32.mxu0 %v48
  %404 = vmatmul.mubr.f32.gmra.mrb[0].mxu0 %v47
  %v405 = vpop.f32.mrb[0].mxu0
  %v406 = vadd.f32 %v332, %v405
  %v407 = vpop.f32.mrb[0].mxu0
  %v408 = vadd.f32 %v336, %v407
  %409 = vdwg.mxu0
  %410 = vmatprep.subr.mxu0 %v136
  %411 = vmatpush1.msra.mxu0 %v135
  %412 = vmatprep.subr.mxu0 %v138
  %413 = vmatpush1.msra.mxu0 %v137
  %414 = vmatprep.subr.mxu0 %v140
  %415 = vmatpush1.msra.mxu0 %v139
  %416 = vmatprep.subr.mxu0 %v142
  %417 = vmatpush1.msra.mxu0 %v141
  %418 = vmatprep.subr.mxu0 %v144
  %419 = vmatpush1.msra.mxu0 %v143
  %420 = vmatprep.subr.mxu0 %v146
  %421 = vmatpush1.msra.mxu0 %v145
  %422 = vmatprep.subr.mxu0 %v148
  %423 = vmatpush1.msra.mxu0 %v147
  %424 = vmatprep.subr.mxu0 %v150
  %425 = vmatpush1.msra.mxu0 %v149
  %426 = vmatprep.subr.mxu0 %v152
  %427 = vmatpush1.msra.mxu0 %v151
  %428 = vmatprep.subr.mxu0 %v154
  %429 = vmatpush1.msra.mxu0 %v153
  %430 = vmatprep.subr.mxu0 %v156
  %431 = vmatpush1.msra.mxu0 %v155
  %432 = vmatprep.subr.mxu0 %v158
  %433 = vmatpush1.msra.mxu0 %v157
  %434 = vmatprep.subr.mxu0 %v160
  %435 = vmatpush1.msra.mxu0 %v159
  %436 = vmatprep.subr.mxu0 %v162
  %437 = vmatpush1.msra.mxu0 %v161
  %438 = vmatprep.subr.mxu0 %v164
  %439 = vmatpush1.msra.mxu0 %v163
  %440 = vmatprep.subr.mxu0 %v166
  %441 = vmatpush1.msra.mxu0 %v165
  %442 = vmatprep.subr.mxu0 %v168
  %443 = vmatpush1.msra.mxu0 %v167
  %444 = vmatprep.subr.mxu0 %v170
  %445 = vmatpush1.msra.mxu0 %v169
  %446 = vmatprep.subr.mxu0 %v172
  %447 = vmatpush1.msra.mxu0 %v171
  %448 = vmatprep.subr.mxu0 %v174
  %449 = vmatpush1.msra.mxu0 %v173
  %450 = vmatprep.subr.mxu0 %v176
  %451 = vmatpush1.msra.mxu0 %v175
  %452 = vmatprep.subr.mxu0 %v178
  %453 = vmatpush1.msra.mxu0 %v177
  %454 = vmatprep.subr.mxu0 %v180
  %455 = vmatpush1.msra.mxu0 %v179
  %456 = vmatprep.subr.mxu0 %v182
  %457 = vmatpush1.msra.mxu0 %v181
  %458 = vmatprep.subr.mxu0 %v184
  %459 = vmatpush1.msra.mxu0 %v183
  %460 = vmatprep.subr.mxu0 %v186
  %461 = vmatpush1.msra.mxu0 %v185
  %462 = vmatprep.subr.mxu0 %v188
  %463 = vmatpush1.msra.mxu0 %v187
  %464 = vmatprep.subr.mxu0 %v190
  %465 = vmatpush1.msra.mxu0 %v189
  %466 = vmatprep.subr.mxu0 %v192
  %467 = vmatpush1.msra.mxu0 %v191
  %468 = vmatprep.subr.mxu0 %v194
  %469 = vmatpush1.msra.mxu0 %v193
  %470 = vmatprep.subr.mxu0 %v196
  %471 = vmatpush1.msra.mxu0 %v195
  %472 = vmatprep.subr.mxu0 %v198
  %473 = vmatpush1.msra.mxu0 %v197
  %474 = vmatprep.mubr.f32.mxu0 %v50
  %475 = vmatmul.mubr.f32.gmra.mrb[0].mxu0 %v49
  %v476 = vpop.f32.mrb[0].mxu0
  %v477 = vadd.f32 %v406, %v476
  %v478 = vpop.f32.mrb[0].mxu0
  %v479 = vadd.f32 %v408, %v478
  %480 = vdwg.mxu0
  %481 = vmatprep.subr.mxu0 %v200
  %482 = vmatpush1.msra.mxu0 %v199
  %483 = vmatprep.subr.mxu0 %v202
  %484 = vmatpush1.msra.mxu0 %v201
  %485 = vmatprep.subr.mxu0 %v204
  %486 = vmatpush1.msra.mxu0 %v203
  %487 = vmatprep.subr.mxu0 %v206
  %488 = vmatpush1.msra.mxu0 %v205
  %489 = vmatprep.subr.mxu0 %v208
  %490 = vmatpush1.msra.mxu0 %v207
  %491 = vmatprep.subr.mxu0 %v210
  %492 = vmatpush1.msra.mxu0 %v209
  %493 = vmatprep.subr.mxu0 %v212
  %494 = vmatpush1.msra.mxu0 %v211
  %495 = vmatprep.subr.mxu0 %v214
  %496 = vmatpush1.msra.mxu0 %v213
  %497 = vmatprep.subr.mxu0 %v216
  %498 = vmatpush1.msra.mxu0 %v215
  %499 = vmatprep.subr.mxu0 %v218
  %500 = vmatpush1.msra.mxu0 %v217
  %501 = vmatprep.subr.mxu0 %v220
  %502 = vmatpush1.msra.mxu0 %v219
  %503 = vmatprep.subr.mxu0 %v222
  %504 = vmatpush1.msra.mxu0 %v221
  %505 = vmatprep.subr.mxu0 %v224
  %506 = vmatpush1.msra.mxu0 %v223
  %507 = vmatprep.subr.mxu0 %v226
  %508 = vmatpush1.msra.mxu0 %v225
  %509 = vmatprep.subr.mxu0 %v228
  %510 = vmatpush1.msra.mxu0 %v227
  %511 = vmatprep.subr.mxu0 %v230
  %512 = vmatpush1.msra.mxu0 %v229
  %513 = vmatprep.subr.mxu0 %v232
  %514 = vmatpush1.msra.mxu0 %v231
  %515 = vmatprep.subr.mxu0 %v234
  %516 = vmatpush1.msra.mxu0 %v233
  %517 = vmatprep.subr.mxu0 %v236
  %518 = vmatpush1.msra.mxu0 %v235
  %519 = vmatprep.subr.mxu0 %v238
  %520 = vmatpush1.msra.mxu0 %v237
  %521 = vmatprep.subr.mxu0 %v240
  %522 = vmatpush1.msra.mxu0 %v239
  %523 = vmatprep.subr.mxu0 %v242
  %524 = vmatpush1.msra.mxu0 %v241
  %525 = vmatprep.subr.mxu0 %v244
  %526 = vmatpush1.msra.mxu0 %v243
  %527 = vmatprep.subr.mxu0 %v246
  %528 = vmatpush1.msra.mxu0 %v245
  %529 = vmatprep.subr.mxu0 %v248
  %530 = vmatpush1.msra.mxu0 %v247
  %531 = vmatprep.subr.mxu0 %v250
  %532 = vmatpush1.msra.mxu0 %v249
  %533 = vmatprep.subr.mxu0 %v252
  %534 = vmatpush1.msra.mxu0 %v251
  %535 = vmatprep.subr.mxu0 %v254
  %536 = vmatpush1.msra.mxu0 %v253
  %537 = vmatprep.subr.mxu0 %v256
  %538 = vmatpush1.msra.mxu0 %v255
  %539 = vmatprep.subr.mxu0 %v258
  %540 = vmatpush1.msra.mxu0 %v257
  %541 = vmatprep.subr.mxu0 %v260
  %542 = vmatpush1.msra.mxu0 %v259
  %543 = vmatprep.subr.mxu0 %v262
  %544 = vmatpush1.msra.mxu0 %v261
  %545 = vmatprep.mubr.f32.mxu0 %v52
  %546 = vmatmul.mubr.f32.gmra.mrb[0].mxu0 %v51
  %v547 = vpop.f32.mrb[0].mxu0
  %v548 = vadd.f32 %v477, %v547
  %v549 = vpop.f32.mrb[0].mxu0
  %v550 = vadd.f32 %v479, %v549
  %551 = vdwg.mxu0
  %552 = vmatprep.subr.mxu0 %v264
  %553 = vmatpush1.msra.mxu0 %v263
  %554 = vmatprep.subr.mxu0 %v266
  %555 = vmatpush1.msra.mxu0 %v265
  %556 = vmatprep.subr.mxu0 %v268
  %557 = vmatpush1.msra.mxu0 %v267
  %558 = vmatprep.subr.mxu0 %v270
  %559 = vmatpush1.msra.mxu0 %v269
  %560 = vmatprep.subr.mxu0 %v272
  %561 = vmatpush1.msra.mxu0 %v271
  %562 = vmatprep.subr.mxu0 %v274
  %563 = vmatpush1.msra.mxu0 %v273
  %564 = vmatprep.subr.mxu0 %v276
  %565 = vmatpush1.msra.mxu0 %v275
  %566 = vmatprep.subr.mxu0 %v278
  %567 = vmatpush1.msra.mxu0 %v277
  %568 = vmatprep.subr.mxu0 %v280
  %569 = vmatpush1.msra.mxu0 %v279
  %570 = vmatprep.subr.mxu0 %v282
  %571 = vmatpush1.msra.mxu0 %v281
  %572 = vmatprep.subr.mxu0 %v284
  %573 = vmatpush1.msra.mxu0 %v283
  %574 = vmatprep.subr.mxu0 %v286
  %575 = vmatpush1.msra.mxu0 %v285
  %576 = vmatprep.subr.mxu0 %v288
  %577 = vmatpush1.msra.mxu0 %v287
  %578 = vmatprep.subr.mxu0 %v290
  %579 = vmatpush1.msra.mxu0 %v289
  %580 = vmatprep.subr.mxu0 %v292
  %581 = vmatpush1.msra.mxu0 %v291
  %582 = vmatprep.subr.mxu0 %v294
  %583 = vmatpush1.msra.mxu0 %v293
  %584 = vmatprep.subr.mxu0 %v296
  %585 = vmatpush1.msra.mxu0 %v295
  %586 = vmatprep.subr.mxu0 %v298
  %587 = vmatpush1.msra.mxu0 %v297
  %588 = vmatprep.subr.mxu0 %v300
  %589 = vmatpush1.msra.mxu0 %v299
  %590 = vmatprep.subr.mxu0 %v302
  %591 = vmatpush1.msra.mxu0 %v301
  %592 = vmatprep.subr.mxu0 %v304
  %593 = vmatpush1.msra.mxu0 %v303
  %594 = vmatprep.subr.mxu0 %v306
  %595 = vmatpush1.msra.mxu0 %v305
  %596 = vmatprep.subr.mxu0 %v308
  %597 = vmatpush1.msra.mxu0 %v307
  %598 = vmatprep.subr.mxu0 %v310
  %599 = vmatpush1.msra.mxu0 %v309
  %600 = vmatprep.subr.mxu0 %v312
  %601 = vmatpush1.msra.mxu0 %v311
  %602 = vmatprep.subr.mxu0 %v314
  %603 = vmatpush1.msra.mxu0 %v313
  %604 = vmatprep.subr.mxu0 %v316
  %605 = vmatpush1.msra.mxu0 %v315
  %606 = vmatprep.subr.mxu0 %v318
  %607 = vmatpush1.msra.mxu0 %v317
  %608 = vmatprep.subr.mxu0 %v320
  %609 = vmatpush1.msra.mxu0 %v319
  %610 = vmatprep.subr.mxu0 %v322
  %611 = vmatpush1.msra.mxu0 %v321
  %612 = vmatprep.subr.mxu0 %v324
  %613 = vmatpush1.msra.mxu0 %v323
  %614 = vmatprep.subr.mxu0 %v326
  %615 = vmatpush1.msra.mxu0 %v325
  %616 = vmatprep.mubr.f32.mxu0 %v54
  %617 = vmatmul.mubr.f32.gmra.mrb[0].mxu0 %v53
  %v618 = vpop.f32.mrb[0].mxu0
  %v619 = vadd.f32 %v548, %v618
  %v620 = vpop.f32.mrb[0].mxu0
  %v621 = vadd.f32 %v550, %v620
  %622 = vdwg.mxu0
  %v623 = vld [vmem:[%s3] sm:$0xff]
  %v624 = vld [vmem:[%s3 + $0x8] sm:$0xff]
  %v625 = vld [vmem:[%s3 + $0x10] sm:$0xff]
  %v626 = vld [vmem:[%s3 + $0x18] sm:$0xff]
  %v627 = vld [vmem:[%s3 + $0x20] sm:$0xff]
  %v628 = vld [vmem:[%s3 + $0x28] sm:$0xff]
  %v629 = vld [vmem:[%s3 + $0x30] sm:$0xff]
  %v630 = vld [vmem:[%s3 + $0x38] sm:$0xff]
  %v631 = vld [vmem:[%s3 + $0x40] sm:$0xff]
  %v632 = vld [vmem:[%s3 + $0x48] sm:$0xff]
  %v633 = vld [vmem:[%s3 + $0x50] sm:$0xff]
  %v634 = vld [vmem:[%s3 + $0x58] sm:$0xff]
  %v635 = vld [vmem:[%s3 + $0x60] sm:$0xff]
  %v636 = vld [vmem:[%s3 + $0x68] sm:$0xff]
  %v637 = vld [vmem:[%s3 + $0x70] sm:$0xff]
  %v638 = vld [vmem:[%s3 + $0x78] sm:$0xff]
  %v639 = vld [vmem:[%s3 + $0x80] sm:$0xff]
  %v640 = vld [vmem:[%s3 + $0x88] sm:$0xff]
  %v641 = vld [vmem:[%s3 + $0x90] sm:$0xff]
  %v642 = vld [vmem:[%s3 + $0x98] sm:$0xff]
  %v643 = vld [vmem:[%s3 + $0xa0] sm:$0xff]
  %v644 = vld [vmem:[%s3 + $0xa8] sm:$0xff]
  %v645 = vld [vmem:[%s3 + $0xb0] sm:$0xff]
  %v646 = vld [vmem:[%s3 + $0xb8] sm:$0xff]
  %v647 = vld [vmem:[%s3 + $0xc0] sm:$0xff]
  %v648 = vld [vmem:[%s3 + $0xc8] sm:$0xff]
  %v649 = vld [vmem:[%s3 + $0xd0] sm:$0xff]
  %v650 = vld [vmem:[%s3 + $0xd8] sm:$0xff]
  %v651 = vld [vmem:[%s3 + $0xe0] sm:$0xff]
  %v652 = vld [vmem:[%s3 + $0xe8] sm:$0xff]
  %v653 = vld [vmem:[%s3 + $0xf0] sm:$0xff]
  %v654 = vld [vmem:[%s3 + $0xf8] sm:$0xff]
  %v655 = vld [vmem:[%s3 + $0x100] sm:$0xff]
  %v656 = vld [vmem:[%s3 + $0x108] sm:$0xff]
  %v657 = vld [vmem:[%s3 + $0x110] sm:$0xff]
  %v658 = vld [vmem:[%s3 + $0x118] sm:$0xff]
  %v659 = vld [vmem:[%s3 + $0x120] sm:$0xff]
  %v660 = vld [vmem:[%s3 + $0x128] sm:$0xff]
  %v661 = vld [vmem:[%s3 + $0x130] sm:$0xff]
  %v662 = vld [vmem:[%s3 + $0x138] sm:$0xff]
  %v663 = vld [vmem:[%s3 + $0x140] sm:$0xff]
  %v664 = vld [vmem:[%s3 + $0x148] sm:$0xff]
  %v665 = vld [vmem:[%s3 + $0x150] sm:$0xff]
  %v666 = vld [vmem:[%s3 + $0x158] sm:$0xff]
  %v667 = vld [vmem:[%s3 + $0x160] sm:$0xff]
  %v668 = vld [vmem:[%s3 + $0x168] sm:$0xff]
  %v669 = vld [vmem:[%s3 + $0x170] sm:$0xff]
  %v670 = vld [vmem:[%s3 + $0x178] sm:$0xff]
  %v671 = vld [vmem:[%s3 + $0x180] sm:$0xff]
  %v672 = vld [vmem:[%s3 + $0x188] sm:$0xff]
  %v673 = vld [vmem:[%s3 + $0x190] sm:$0xff]
  %v674 = vld [vmem:[%s3 + $0x198] sm:$0xff]
  %v675 = vld [vmem:[%s3 + $0x1a0] sm:$0xff]
  %v676 = vld [vmem:[%s3 + $0x1a8] sm:$0xff]
  %v677 = vld [vmem:[%s3 + $0x1b0] sm:$0xff]
  %v678 = vld [vmem:[%s3 + $0x1b8] sm:$0xff]
  %v679 = vld [vmem:[%s3 + $0x1c0] sm:$0xff]
  %v680 = vld [vmem:[%s3 + $0x1c8] sm:$0xff]
  %v681 = vld [vmem:[%s3 + $0x1d0] sm:$0xff]
  %v682 = vld [vmem:[%s3 + $0x1d8] sm:$0xff]
  %v683 = vld [vmem:[%s3 + $0x1e0] sm:$0xff]
  %v684 = vld [vmem:[%s3 + $0x1e8] sm:$0xff]
  %v685 = vld [vmem:[%s3 + $0x1f0] sm:$0xff]
  %v686 = vld [vmem:[%s3 + $0x1f8] sm:$0xff]
  %v687 = vld [vmem:[%s3 + $0x200] sm:$0xff]
  %v688 = vld [vmem:[%s3 + $0x208] sm:$0xff]
  %v689 = vld [vmem:[%s3 + $0x210] sm:$0xff]
  %v690 = vld [vmem:[%s3 + $0x218] sm:$0xff]
  %v691 = vld [vmem:[%s3 + $0x220] sm:$0xff]
  %v692 = vld [vmem:[%s3 + $0x228] sm:$0xff]
  %v693 = vld [vmem:[%s3 + $0x230] sm:$0xff]
  %v694 = vld [vmem:[%s3 + $0x238] sm:$0xff]
  %v695 = vld [vmem:[%s3 + $0x240] sm:$0xff]
  %v696 = vld [vmem:[%s3 + $0x248] sm:$0xff]
  %v697 = vld [vmem:[%s3 + $0x250] sm:$0xff]
  %v698 = vld [vmem:[%s3 + $0x258] sm:$0xff]
  %v699 = vld [vmem:[%s3 + $0x260] sm:$0xff]
  %v700 = vld [vmem:[%s3 + $0x268] sm:$0xff]
  %v701 = vld [vmem:[%s3 + $0x270] sm:$0xff]
  %v702 = vld [vmem:[%s3 + $0x278] sm:$0xff]
  %v703 = vld [vmem:[%s3 + $0x280] sm:$0xff]
  %v704 = vld [vmem:[%s3 + $0x288] sm:$0xff]
  %v705 = vld [vmem:[%s3 + $0x290] sm:$0xff]
  %v706 = vld [vmem:[%s3 + $0x298] sm:$0xff]
  %v707 = vld [vmem:[%s3 + $0x2a0] sm:$0xff]
  %v708 = vld [vmem:[%s3 + $0x2a8] sm:$0xff]
  %v709 = vld [vmem:[%s3 + $0x2b0] sm:$0xff]
  %v710 = vld [vmem:[%s3 + $0x2b8] sm:$0xff]
  %v711 = vld [vmem:[%s3 + $0x2c0] sm:$0xff]
  %v712 = vld [vmem:[%s3 + $0x2c8] sm:$0xff]
  %v713 = vld [vmem:[%s3 + $0x2d0] sm:$0xff]
  %v714 = vld [vmem:[%s3 + $0x2d8] sm:$0xff]
  %v715 = vld [vmem:[%s3 + $0x2e0] sm:$0xff]
  %v716 = vld [vmem:[%s3 + $0x2e8] sm:$0xff]
  %v717 = vld [vmem:[%s3 + $0x2f0] sm:$0xff]
  %v718 = vld [vmem:[%s3 + $0x2f8] sm:$0xff]
  %v719 = vld [vmem:[%s3 + $0x300] sm:$0xff]
  %v720 = vld [vmem:[%s3 + $0x308] sm:$0xff]
  %v721 = vld [vmem:[%s3 + $0x310] sm:$0xff]
  %v722 = vld [vmem:[%s3 + $0x318] sm:$0xff]
  %v723 = vld [vmem:[%s3 + $0x320] sm:$0xff]
  %v724 = vld [vmem:[%s3 + $0x328] sm:$0xff]
  %v725 = vld [vmem:[%s3 + $0x330] sm:$0xff]
  %v726 = vld [vmem:[%s3 + $0x338] sm:$0xff]
  %v727 = vld [vmem:[%s3 + $0x340] sm:$0xff]
  %v728 = vld [vmem:[%s3 + $0x348] sm:$0xff]
  %v729 = vld [vmem:[%s3 + $0x350] sm:$0xff]
  %v730 = vld [vmem:[%s3 + $0x358] sm:$0xff]
  %v731 = vld [vmem:[%s3 + $0x360] sm:$0xff]
  %v732 = vld [vmem:[%s3 + $0x368] sm:$0xff]
  %v733 = vld [vmem:[%s3 + $0x370] sm:$0xff]
  %v734 = vld [vmem:[%s3 + $0x378] sm:$0xff]
  %v735 = vld [vmem:[%s3 + $0x380] sm:$0xff]
  %v736 = vld [vmem:[%s3 + $0x388] sm:$0xff]
  %v737 = vld [vmem:[%s3 + $0x390] sm:$0xff]
  %v738 = vld [vmem:[%s3 + $0x398] sm:$0xff]
  %v739 = vld [vmem:[%s3 + $0x3a0] sm:$0xff]
  %v740 = vld [vmem:[%s3 + $0x3a8] sm:$0xff]
  %v741 = vld [vmem:[%s3 + $0x3b0] sm:$0xff]
  %v742 = vld [vmem:[%s3 + $0x3b8] sm:$0xff]
  %v743 = vld [vmem:[%s3 + $0x3c0] sm:$0xff]
  %v744 = vld [vmem:[%s3 + $0x3c8] sm:$0xff]
  %v745 = vld [vmem:[%s3 + $0x3d0] sm:$0xff]
  %v746 = vld [vmem:[%s3 + $0x3d8] sm:$0xff]
  %v747 = vld [vmem:[%s3 + $0x3e0] sm:$0xff]
  %v748 = vld [vmem:[%s3 + $0x3e8] sm:$0xff]
  %v749 = vld [vmem:[%s3 + $0x3f0] sm:$0xff]
  %v750 = vld [vmem:[%s3 + $0x3f8] sm:$0xff]
  %v751 = vld [vmem:[%s3 + $0x400] sm:$0xff]
  %v752 = vld [vmem:[%s3 + $0x408] sm:$0xff]
  %v753 = vld [vmem:[%s3 + $0x410] sm:$0xff]
  %v754 = vld [vmem:[%s3 + $0x418] sm:$0xff]
  %v755 = vld [vmem:[%s3 + $0x420] sm:$0xff]
  %v756 = vld [vmem:[%s3 + $0x428] sm:$0xff]
  %v757 = vld [vmem:[%s3 + $0x430] sm:$0xff]
  %v758 = vld [vmem:[%s3 + $0x438] sm:$0xff]
  %v759 = vld [vmem:[%s3 + $0x440] sm:$0xff]
  %v760 = vld [vmem:[%s3 + $0x448] sm:$0xff]
  %v761 = vld [vmem:[%s3 + $0x450] sm:$0xff]
  %v762 = vld [vmem:[%s3 + $0x458] sm:$0xff]
  %v763 = vld [vmem:[%s3 + $0x460] sm:$0xff]
  %v764 = vld [vmem:[%s3 + $0x468] sm:$0xff]
  %v765 = vld [vmem:[%s3 + $0x470] sm:$0xff]
  %v766 = vld [vmem:[%s3 + $0x478] sm:$0xff]
  %v767 = vld [vmem:[%s3 + $0x480] sm:$0xff]
  %v768 = vld [vmem:[%s3 + $0x488] sm:$0xff]
  %v769 = vld [vmem:[%s3 + $0x490] sm:$0xff]
  %v770 = vld [vmem:[%s3 + $0x498] sm:$0xff]
  %v771 = vld [vmem:[%s3 + $0x4a0] sm:$0xff]
  %v772 = vld [vmem:[%s3 + $0x4a8] sm:$0xff]
  %v773 = vld [vmem:[%s3 + $0x4b0] sm:$0xff]
  %v774 = vld [vmem:[%s3 + $0x4b8] sm:$0xff]
  %v775 = vld [vmem:[%s3 + $0x4c0] sm:$0xff]
  %v776 = vld [vmem:[%s3 + $0x4c8] sm:$0xff]
  %v777 = vld [vmem:[%s3 + $0x4d0] sm:$0xff]
  %v778 = vld [vmem:[%s3 + $0x4d8] sm:$0xff]
  %v779 = vld [vmem:[%s3 + $0x4e0] sm:$0xff]
  %v780 = vld [vmem:[%s3 + $0x4e8] sm:$0xff]
  %v781 = vld [vmem:[%s3 + $0x4f0] sm:$0xff]
  %v782 = vld [vmem:[%s3 + $0x4f8] sm:$0xff]
  %v783 = vld [vmem:[%s3 + $0x500] sm:$0xff]
  %v784 = vld [vmem:[%s3 + $0x508] sm:$0xff]
  %v785 = vld [vmem:[%s3 + $0x510] sm:$0xff]
  %v786 = vld [vmem:[%s3 + $0x518] sm:$0xff]
  %v787 = vld [vmem:[%s3 + $0x520] sm:$0xff]
  %v788 = vld [vmem:[%s3 + $0x528] sm:$0xff]
  %v789 = vld [vmem:[%s3 + $0x530] sm:$0xff]
  %v790 = vld [vmem:[%s3 + $0x538] sm:$0xff]
  %v791 = vld [vmem:[%s3 + $0x540] sm:$0xff]
  %v792 = vld [vmem:[%s3 + $0x548] sm:$0xff]
  %v793 = vld [vmem:[%s3 + $0x550] sm:$0xff]
  %v794 = vld [vmem:[%s3 + $0x558] sm:$0xff]
  %v795 = vld [vmem:[%s3 + $0x560] sm:$0xff]
  %v796 = vld [vmem:[%s3 + $0x568] sm:$0xff]
  %v797 = vld [vmem:[%s3 + $0x570] sm:$0xff]
  %v798 = vld [vmem:[%s3 + $0x578] sm:$0xff]
  %v799 = vld [vmem:[%s3 + $0x580] sm:$0xff]
  %v800 = vld [vmem:[%s3 + $0x588] sm:$0xff]
  %v801 = vld [vmem:[%s3 + $0x590] sm:$0xff]
  %v802 = vld [vmem:[%s3 + $0x598] sm:$0xff]
  %v803 = vld [vmem:[%s3 + $0x5a0] sm:$0xff]
  %v804 = vld [vmem:[%s3 + $0x5a8] sm:$0xff]
  %v805 = vld [vmem:[%s3 + $0x5b0] sm:$0xff]
  %v806 = vld [vmem:[%s3 + $0x5b8] sm:$0xff]
  %v807 = vld [vmem:[%s3 + $0x5c0] sm:$0xff]
  %v808 = vld [vmem:[%s3 + $0x5c8] sm:$0xff]
  %v809 = vld [vmem:[%s3 + $0x5d0] sm:$0xff]
  %v810 = vld [vmem:[%s3 + $0x5d8] sm:$0xff]
  %v811 = vld [vmem:[%s3 + $0x5e0] sm:$0xff]
  %v812 = vld [vmem:[%s3 + $0x5e8] sm:$0xff]
  %v813 = vld [vmem:[%s3 + $0x5f0] sm:$0xff]
  %v814 = vld [vmem:[%s3 + $0x5f8] sm:$0xff]
  %v815 = vld [vmem:[%s3 + $0x600] sm:$0xff]
  %v816 = vld [vmem:[%s3 + $0x608] sm:$0xff]
  %v817 = vld [vmem:[%s3 + $0x610] sm:$0xff]
  %v818 = vld [vmem:[%s3 + $0x618] sm:$0xff]
  %v819 = vld [vmem:[%s3 + $0x620] sm:$0xff]
  %v820 = vld [vmem:[%s3 + $0x628] sm:$0xff]
  %v821 = vld [vmem:[%s3 + $0x630] sm:$0xff]
  %v822 = vld [vmem:[%s3 + $0x638] sm:$0xff]
  %v823 = vld [vmem:[%s3 + $0x640] sm:$0xff]
  %v824 = vld [vmem:[%s3 + $0x648] sm:$0xff]
  %v825 = vld [vmem:[%s3 + $0x650] sm:$0xff]
  %v826 = vld [vmem:[%s3 + $0x658] sm:$0xff]
  %v827 = vld [vmem:[%s3 + $0x660] sm:$0xff]
  %v828 = vld [vmem:[%s3 + $0x668] sm:$0xff]
  %v829 = vld [vmem:[%s3 + $0x670] sm:$0xff]
  %v830 = vld [vmem:[%s3 + $0x678] sm:$0xff]
  %v831 = vld [vmem:[%s3 + $0x680] sm:$0xff]
  %v832 = vld [vmem:[%s3 + $0x688] sm:$0xff]
  %v833 = vld [vmem:[%s3 + $0x690] sm:$0xff]
  %v834 = vld [vmem:[%s3 + $0x698] sm:$0xff]
  %v835 = vld [vmem:[%s3 + $0x6a0] sm:$0xff]
  %v836 = vld [vmem:[%s3 + $0x6a8] sm:$0xff]
  %v837 = vld [vmem:[%s3 + $0x6b0] sm:$0xff]
  %v838 = vld [vmem:[%s3 + $0x6b8] sm:$0xff]
  %v839 = vld [vmem:[%s3 + $0x6c0] sm:$0xff]
  %v840 = vld [vmem:[%s3 + $0x6c8] sm:$0xff]
  %v841 = vld [vmem:[%s3 + $0x6d0] sm:$0xff]
  %v842 = vld [vmem:[%s3 + $0x6d8] sm:$0xff]
  %v843 = vld [vmem:[%s3 + $0x6e0] sm:$0xff]
  %v844 = vld [vmem:[%s3 + $0x6e8] sm:$0xff]
  %v845 = vld [vmem:[%s3 + $0x6f0] sm:$0xff]
  %v846 = vld [vmem:[%s3 + $0x6f8] sm:$0xff]
  %v847 = vld [vmem:[%s3 + $0x700] sm:$0xff]
  %v848 = vld [vmem:[%s3 + $0x708] sm:$0xff]
  %v849 = vld [vmem:[%s3 + $0x710] sm:$0xff]
  %v850 = vld [vmem:[%s3 + $0x718] sm:$0xff]
  %v851 = vld [vmem:[%s3 + $0x720] sm:$0xff]
  %v852 = vld [vmem:[%s3 + $0x728] sm:$0xff]
  %v853 = vld [vmem:[%s3 + $0x730] sm:$0xff]
  %v854 = vld [vmem:[%s3 + $0x738] sm:$0xff]
  %v855 = vld [vmem:[%s3 + $0x740] sm:$0xff]
  %v856 = vld [vmem:[%s3 + $0x748] sm:$0xff]
  %v857 = vld [vmem:[%s3 + $0x750] sm:$0xff]
  %v858 = vld [vmem:[%s3 + $0x758] sm:$0xff]
  %v859 = vld [vmem:[%s3 + $0x760] sm:$0xff]
  %v860 = vld [vmem:[%s3 + $0x768] sm:$0xff]
  %v861 = vld [vmem:[%s3 + $0x770] sm:$0xff]
  %v862 = vld [vmem:[%s3 + $0x778] sm:$0xff]
  %v863 = vld [vmem:[%s3 + $0x780] sm:$0xff]
  %v864 = vld [vmem:[%s3 + $0x788] sm:$0xff]
  %v865 = vld [vmem:[%s3 + $0x790] sm:$0xff]
  %v866 = vld [vmem:[%s3 + $0x798] sm:$0xff]
  %v867 = vld [vmem:[%s3 + $0x7a0] sm:$0xff]
  %v868 = vld [vmem:[%s3 + $0x7a8] sm:$0xff]
  %v869 = vld [vmem:[%s3 + $0x7b0] sm:$0xff]
  %v870 = vld [vmem:[%s3 + $0x7b8] sm:$0xff]
  %v871 = vld [vmem:[%s3 + $0x7c0] sm:$0xff]
  %v872 = vld [vmem:[%s3 + $0x7c8] sm:$0xff]
  %v873 = vld [vmem:[%s3 + $0x7d0] sm:$0xff]
  %v874 = vld [vmem:[%s3 + $0x7d8] sm:$0xff]
  %v875 = vld [vmem:[%s3 + $0x7e0] sm:$0xff]
  %v876 = vld [vmem:[%s3 + $0x7e8] sm:$0xff]
  %v877 = vld [vmem:[%s3 + $0x7f0] sm:$0xff]
  %v878 = vld [vmem:[%s3 + $0x7f8] sm:$0xff]
  %879 = vmatprep.subr.mxu0 %v624
  %880 = vmatpush1.msra.mxu0 %v623
  %881 = vmatprep.subr.mxu0 %v626
  %882 = vmatpush1.msra.mxu0 %v625
  %883 = vmatprep.subr.mxu0 %v628
  %884 = vmatpush1.msra.mxu0 %v627
  %885 = vmatprep.subr.mxu0 %v630
  %886 = vmatpush1.msra.mxu0 %v629
  %887 = vmatprep.subr.mxu0 %v632
  %888 = vmatpush1.msra.mxu0 %v631
  %889 = vmatprep.subr.mxu0 %v634
  %890 = vmatpush1.msra.mxu0 %v633
  %891 = vmatprep.subr.mxu0 %v636
  %892 = vmatpush1.msra.mxu0 %v635
  %893 = vmatprep.subr.mxu0 %v638
  %894 = vmatpush1.msra.mxu0 %v637
  %895 = vmatprep.subr.mxu0 %v640
  %896 = vmatpush1.msra.mxu0 %v639
  %897 = vmatprep.subr.mxu0 %v642
  %898 = vmatpush1.msra.mxu0 %v641
  %899 = vmatprep.subr.mxu0 %v644
  %900 = vmatpush1.msra.mxu0 %v643
  %901 = vmatprep.subr.mxu0 %v646
  %902 = vmatpush1.msra.mxu0 %v645
  %903 = vmatprep.subr.mxu0 %v648
  %904 = vmatpush1.msra.mxu0 %v647
  %905 = vmatprep.subr.mxu0 %v650
  %906 = vmatpush1.msra.mxu0 %v649
  %907 = vmatprep.subr.mxu0 %v652
  %908 = vmatpush1.msra.mxu0 %v651
  %909 = vmatprep.subr.mxu0 %v654
  %910 = vmatpush1.msra.mxu0 %v653
  %911 = vmatprep.subr.mxu0 %v656
  %912 = vmatpush1.msra.mxu0 %v655
  %913 = vmatprep.subr.mxu0 %v658
  %914 = vmatpush1.msra.mxu0 %v657
  %915 = vmatprep.subr.mxu0 %v660
  %916 = vmatpush1.msra.mxu0 %v659
  %917 = vmatprep.subr.mxu0 %v662
  %918 = vmatpush1.msra.mxu0 %v661
  %919 = vmatprep.subr.mxu0 %v664
  %920 = vmatpush1.msra.mxu0 %v663
  %921 = vmatprep.subr.mxu0 %v666
  %922 = vmatpush1.msra.mxu0 %v665
  %923 = vmatprep.subr.mxu0 %v668
  %924 = vmatpush1.msra.mxu0 %v667
  %925 = vmatprep.subr.mxu0 %v670
  %926 = vmatpush1.msra.mxu0 %v669
  %927 = vmatprep.subr.mxu0 %v672
  %928 = vmatpush1.msra.mxu0 %v671
  %929 = vmatprep.subr.mxu0 %v674
  %930 = vmatpush1.msra.mxu0 %v673
  %931 = vmatprep.subr.mxu0 %v676
  %932 = vmatpush1.msra.mxu0 %v675
  %933 = vmatprep.subr.mxu0 %v678
  %934 = vmatpush1.msra.mxu0 %v677
  %935 = vmatprep.subr.mxu0 %v680
  %936 = vmatpush1.msra.mxu0 %v679
  %937 = vmatprep.subr.mxu0 %v682
  %938 = vmatpush1.msra.mxu0 %v681
  %939 = vmatprep.subr.mxu0 %v684
  %940 = vmatpush1.msra.mxu0 %v683
  %941 = vmatprep.subr.mxu0 %v686
  %942 = vmatpush1.msra.mxu0 %v685
  %943 = vmatprep.mubr.f32.mxu0 %v64
  %944 = vmatmul.mubr.f32.gmra.mrb[0].mxu0 %v63
  %v945 = vpop.f32.mrb[0].mxu0
  %v946 = vadd.f32 0.0, %v945
  %v947 = vpop.f32.mrb[0].mxu0
  %v948 = vadd.f32 0.0, %v947
  %949 = vdwg.mxu0
  %950 = vmatprep.subr.mxu0 %v688
  %951 = vmatpush1.msra.mxu0 %v687
  %952 = vmatprep.subr.mxu0 %v690
  %953 = vmatpush1.msra.mxu0 %v689
  %954 = vmatprep.subr.mxu0 %v692
  %955 = vmatpush1.msra.mxu0 %v691
  %956 = vmatprep.subr.mxu0 %v694
  %957 = vmatpush1.msra.mxu0 %v693
  %958 = vmatprep.subr.mxu0 %v696
  %959 = vmatpush1.msra.mxu0 %v695
  %960 = vmatprep.subr.mxu0 %v698
  %961 = vmatpush1.msra.mxu0 %v697
  %962 = vmatprep.subr.mxu0 %v700
  %963 = vmatpush1.msra.mxu0 %v699
  %964 = vmatprep.subr.mxu0 %v702
  %965 = vmatpush1.msra.mxu0 %v701
  %966 = vmatprep.subr.mxu0 %v704
  %967 = vmatpush1.msra.mxu0 %v703
  %968 = vmatprep.subr.mxu0 %v706
  %969 = vmatpush1.msra.mxu0 %v705
  %970 = vmatprep.subr.mxu0 %v708
  %971 = vmatpush1.msra.mxu0 %v707
  %972 = vmatprep.subr.mxu0 %v710
  %973 = vmatpush1.msra.mxu0 %v709
  %974 = vmatprep.subr.mxu0 %v712
  %975 = vmatpush1.msra.mxu0 %v711
  %976 = vmatprep.subr.mxu0 %v714
  %977 = vmatpush1.msra.mxu0 %v713
  %978 = vmatprep.subr.mxu0 %v716
  %979 = vmatpush1.msra.mxu0 %v715
  %980 = vmatprep.subr.mxu0 %v718
  %981 = vmatpush1.msra.mxu0 %v717
  %982 = vmatprep.subr.mxu0 %v720
  %983 = vmatpush1.msra.mxu0 %v719
  %984 = vmatprep.subr.mxu0 %v722
  %985 = vmatpush1.msra.mxu0 %v721
  %986 = vmatprep.subr.mxu0 %v724
  %987 = vmatpush1.msra.mxu0 %v723
  %988 = vmatprep.subr.mxu0 %v726
  %989 = vmatpush1.msra.mxu0 %v725
  %990 = vmatprep.subr.mxu0 %v728
  %991 = vmatpush1.msra.mxu0 %v727
  %992 = vmatprep.subr.mxu0 %v730
  %993 = vmatpush1.msra.mxu0 %v729
  %994 = vmatprep.subr.mxu0 %v732
  %995 = vmatpush1.msra.mxu0 %v731
  %996 = vmatprep.subr.mxu0 %v734
  %997 = vmatpush1.msra.mxu0 %v733
  %998 = vmatprep.subr.mxu0 %v736
  %999 = vmatpush1.msra.mxu0 %v735
  %1000 = vmatprep.subr.mxu0 %v738
  %1001 = vmatpush1.msra.mxu0 %v737
  %1002 = vmatprep.subr.mxu0 %v740
  %1003 = vmatpush1.msra.mxu0 %v739
  %1004 = vmatprep.subr.mxu0 %v742
  %1005 = vmatpush1.msra.mxu0 %v741
  %1006 = vmatprep.subr.mxu0 %v744
  %1007 = vmatpush1.msra.mxu0 %v743
  %1008 = vmatprep.subr.mxu0 %v746
  %1009 = vmatpush1.msra.mxu0 %v745
  %1010 = vmatprep.subr.mxu0 %v748
  %1011 = vmatpush1.msra.mxu0 %v747
  %1012 = vmatprep.subr.mxu0 %v750
  %1013 = vmatpush1.msra.mxu0 %v749
  %1014 = vmatprep.mubr.f32.mxu0 %v66
  %1015 = vmatmul.mubr.f32.gmra.mrb[0].mxu0 %v65
  %v1016 = vpop.f32.mrb[0].mxu0
  %v1017 = vadd.f32 %v946, %v1016
  %v1018 = vpop.f32.mrb[0].mxu0
  %v1019 = vadd.f32 %v948, %v1018
  %1020 = vdwg.mxu0
  %1021 = vmatprep.subr.mxu0 %v752
  %1022 = vmatpush1.msra.mxu0 %v751
  %1023 = vmatprep.subr.mxu0 %v754
  %1024 = vmatpush1.msra.mxu0 %v753
  %1025 = vmatprep.subr.mxu0 %v756
  %1026 = vmatpush1.msra.mxu0 %v755
  %1027 = vmatprep.subr.mxu0 %v758
  %1028 = vmatpush1.msra.mxu0 %v757
  %1029 = vmatprep.subr.mxu0 %v760
  %1030 = vmatpush1.msra.mxu0 %v759
  %1031 = vmatprep.subr.mxu0 %v762
  %1032 = vmatpush1.msra.mxu0 %v761
  %1033 = vmatprep.subr.mxu0 %v764
  %1034 = vmatpush1.msra.mxu0 %v763
  %1035 = vmatprep.subr.mxu0 %v766
  %1036 = vmatpush1.msra.mxu0 %v765
  %1037 = vmatprep.subr.mxu0 %v768
  %1038 = vmatpush1.msra.mxu0 %v767
  %1039 = vmatprep.subr.mxu0 %v770
  %1040 = vmatpush1.msra.mxu0 %v769
  %1041 = vmatprep.subr.mxu0 %v772
  %1042 = vmatpush1.msra.mxu0 %v771
  %1043 = vmatprep.subr.mxu0 %v774
  %1044 = vmatpush1.msra.mxu0 %v773
  %1045 = vmatprep.subr.mxu0 %v776
  %1046 = vmatpush1.msra.mxu0 %v775
  %1047 = vmatprep.subr.mxu0 %v778
  %1048 = vmatpush1.msra.mxu0 %v777
  %1049 = vmatprep.subr.mxu0 %v780
  %1050 = vmatpush1.msra.mxu0 %v779
  %1051 = vmatprep.subr.mxu0 %v782
  %1052 = vmatpush1.msra.mxu0 %v781
  %1053 = vmatprep.subr.mxu0 %v784
  %1054 = vmatpush1.msra.mxu0 %v783
  %1055 = vmatprep.subr.mxu0 %v786
  %1056 = vmatpush1.msra.mxu0 %v785
  %1057 = vmatprep.subr.mxu0 %v788
  %1058 = vmatpush1.msra.mxu0 %v787
  %1059 = vmatprep.subr.mxu0 %v790
  %1060 = vmatpush1.msra.mxu0 %v789
  %1061 = vmatprep.subr.mxu0 %v792
  %1062 = vmatpush1.msra.mxu0 %v791
  %1063 = vmatprep.subr.mxu0 %v794
  %1064 = vmatpush1.msra.mxu0 %v793
  %1065 = vmatprep.subr.mxu0 %v796
  %1066 = vmatpush1.msra.mxu0 %v795
  %1067 = vmatprep.subr.mxu0 %v798
  %1068 = vmatpush1.msra.mxu0 %v797
  %1069 = vmatprep.subr.mxu0 %v800
  %1070 = vmatpush1.msra.mxu0 %v799
  %1071 = vmatprep.subr.mxu0 %v802
  %1072 = vmatpush1.msra.mxu0 %v801
  %1073 = vmatprep.subr.mxu0 %v804
  %1074 = vmatpush1.msra.mxu0 %v803
  %1075 = vmatprep.subr.mxu0 %v806
  %1076 = vmatpush1.msra.mxu0 %v805
  %1077 = vmatprep.subr.mxu0 %v808
  %1078 = vmatpush1.msra.mxu0 %v807
  %1079 = vmatprep.subr.mxu0 %v810
  %1080 = vmatpush1.msra.mxu0 %v809
  %1081 = vmatprep.subr.mxu0 %v812
  %1082 = vmatpush1.msra.mxu0 %v811
  %1083 = vmatprep.subr.mxu0 %v814
  %1084 = vmatpush1.msra.mxu0 %v813
  %1085 = vmatprep.mubr.f32.mxu0 %v68
  %1086 = vmatmul.mubr.f32.gmra.mrb[0].mxu0 %v67
  %v1087 = vpop.f32.mrb[0].mxu0
  %v1088 = vadd.f32 %v1017, %v1087
  %v1089 = vpop.f32.mrb[0].mxu0
  %v1090 = vadd.f32 %v1019, %v1089
  %1091 = vdwg.mxu0
  %1092 = vmatprep.subr.mxu0 %v816
  %1093 = vmatpush1.msra.mxu0 %v815
  %1094 = vmatprep.subr.mxu0 %v818
  %1095 = vmatpush1.msra.mxu0 %v817
  %1096 = vmatprep.subr.mxu0 %v820
  %1097 = vmatpush1.msra.mxu0 %v819
  %1098 = vmatprep.subr.mxu0 %v822
  %1099 = vmatpush1.msra.mxu0 %v821
  %1100 = vmatprep.subr.mxu0 %v824
  %1101 = vmatpush1.msra.mxu0 %v823
  %1102 = vmatprep.subr.mxu0 %v826
  %1103 = vmatpush1.msra.mxu0 %v825
  %1104 = vmatprep.subr.mxu0 %v828
  %1105 = vmatpush1.msra.mxu0 %v827
  %1106 = vmatprep.subr.mxu0 %v830
  %1107 = vmatpush1.msra.mxu0 %v829
  %1108 = vmatprep.subr.mxu0 %v832
  %1109 = vmatpush1.msra.mxu0 %v831
  %1110 = vmatprep.subr.mxu0 %v834
  %1111 = vmatpush1.msra.mxu0 %v833
  %1112 = vmatprep.subr.mxu0 %v836
  %1113 = vmatpush1.msra.mxu0 %v835
  %1114 = vmatprep.subr.mxu0 %v838
  %1115 = vmatpush1.msra.mxu0 %v837
  %1116 = vmatprep.subr.mxu0 %v840
  %1117 = vmatpush1.msra.mxu0 %v839
  %1118 = vmatprep.subr.mxu0 %v842
  %1119 = vmatpush1.msra.mxu0 %v841
  %1120 = vmatprep.subr.mxu0 %v844
  %1121 = vmatpush1.msra.mxu0 %v843
  %1122 = vmatprep.subr.mxu0 %v846
  %1123 = vmatpush1.msra.mxu0 %v845
  %1124 = vmatprep.subr.mxu0 %v848
  %1125 = vmatpush1.msra.mxu0 %v847
  %1126 = vmatprep.subr.mxu0 %v850
  %1127 = vmatpush1.msra.mxu0 %v849
  %1128 = vmatprep.subr.mxu0 %v852
  %1129 = vmatpush1.msra.mxu0 %v851
  %1130 = vmatprep.subr.mxu0 %v854
  %1131 = vmatpush1.msra.mxu0 %v853
  %1132 = vmatprep.subr.mxu0 %v856
  %1133 = vmatpush1.msra.mxu0 %v855
  %1134 = vmatprep.subr.mxu0 %v858
  %1135 = vmatpush1.msra.mxu0 %v857
  %1136 = vmatprep.subr.mxu0 %v860
  %1137 = vmatpush1.msra.mxu0 %v859
  %1138 = vmatprep.subr.mxu0 %v862
  %1139 = vmatpush1.msra.mxu0 %v861
  %1140 = vmatprep.subr.mxu0 %v864
  %1141 = vmatpush1.msra.mxu0 %v863
  %1142 = vmatprep.subr.mxu0 %v866
  %1143 = vmatpush1.msra.mxu0 %v865
  %1144 = vmatprep.subr.mxu0 %v868
  %1145 = vmatpush1.msra.mxu0 %v867
  %1146 = vmatprep.subr.mxu0 %v870
  %1147 = vmatpush1.msra.mxu0 %v869
  %1148 = vmatprep.subr.mxu0 %v872
  %1149 = vmatpush1.msra.mxu0 %v871
  %1150 = vmatprep.subr.mxu0 %v874
  %1151 = vmatpush1.msra.mxu0 %v873
  %1152 = vmatprep.subr.mxu0 %v876
  %1153 = vmatpush1.msra.mxu0 %v875
  %1154 = vmatprep.subr.mxu0 %v878
  %1155 = vmatpush1.msra.mxu0 %v877
  %1156 = vmatprep.mubr.f32.mxu0 %v70
  %1157 = vmatmul.mubr.f32.gmra.mrb[0].mxu0 %v69
  %v1158 = vpop.f32.mrb[0].mxu0
  %v1159 = vadd.f32 %v1088, %v1158
  %v1160 = vpop.f32.mrb[0].mxu0
  %v1161 = vadd.f32 %v1090, %v1160
  %1162 = vdwg.mxu0
  %v1163 = vsub.f32 %v619, %v1159
  %v1164 = vsub.f32 %v621, %v1161
  %v1165 = vmax.f32 %v1163, 0.0
  %v1166 = vmax.f32 %v1164, 0.0
  %v1167 = vadd.f32 %v619, %v1159
  %v1168 = vadd.f32 %v621, %v1161
  %v1169 = vmax.f32 %v1167, 0.0
  %v1170 = vmax.f32 %v1168, 0.0
  %v1171 = vadd.f32 %v1165, %v1169
  %v1172 = vadd.f32 %v1166, %v1170
  %v1173 = vmul.f32 %v1171, 0.5
  %v1174 = vmul.f32 %v1172, 0.5
  %v1175 = vsub.f32 %v1169, %v1165
  %v1176 = vsub.f32 %v1170, %v1166
  %v1177 = vmul.f32 %v1175, 0.5
  %v1178 = vmul.f32 %v1176, 0.5
  %v1179 = vld [vmem:[%s5] sm:$0xff]
  %v1180 = vld [vmem:[%s5 + $0x8] sm:$0xff]
  %v1181 = vld [vmem:[%s5 + $0x10] sm:$0xff]
  %v1182 = vld [vmem:[%s5 + $0x18] sm:$0xff]
  %v1183 = vld [vmem:[%s5 + $0x20] sm:$0xff]
  %v1184 = vld [vmem:[%s5 + $0x28] sm:$0xff]
  %v1185 = vld [vmem:[%s5 + $0x30] sm:$0xff]
  %v1186 = vld [vmem:[%s5 + $0x38] sm:$0xff]
  %v1187 = vld [vmem:[%s5 + $0x40] sm:$0xff]
  %v1188 = vld [vmem:[%s5 + $0x48] sm:$0xff]
  %v1189 = vld [vmem:[%s5 + $0x50] sm:$0xff]
  %v1190 = vld [vmem:[%s5 + $0x58] sm:$0xff]
  %v1191 = vld [vmem:[%s5 + $0x60] sm:$0xff]
  %v1192 = vld [vmem:[%s5 + $0x68] sm:$0xff]
  %v1193 = vld [vmem:[%s5 + $0x70] sm:$0xff]
  %v1194 = vld [vmem:[%s5 + $0x78] sm:$0xff]
  %v1195 = vld [vmem:[%s5 + $0x80] sm:$0xff]
  %v1196 = vld [vmem:[%s5 + $0x88] sm:$0xff]
  %v1197 = vld [vmem:[%s5 + $0x90] sm:$0xff]
  %v1198 = vld [vmem:[%s5 + $0x98] sm:$0xff]
  %v1199 = vld [vmem:[%s5 + $0xa0] sm:$0xff]
  %v1200 = vld [vmem:[%s5 + $0xa8] sm:$0xff]
  %v1201 = vld [vmem:[%s5 + $0xb0] sm:$0xff]
  %v1202 = vld [vmem:[%s5 + $0xb8] sm:$0xff]
  %v1203 = vld [vmem:[%s5 + $0xc0] sm:$0xff]
  %v1204 = vld [vmem:[%s5 + $0xc8] sm:$0xff]
  %v1205 = vld [vmem:[%s5 + $0xd0] sm:$0xff]
  %v1206 = vld [vmem:[%s5 + $0xd8] sm:$0xff]
  %v1207 = vld [vmem:[%s5 + $0xe0] sm:$0xff]
  %v1208 = vld [vmem:[%s5 + $0xe8] sm:$0xff]
  %v1209 = vld [vmem:[%s5 + $0xf0] sm:$0xff]
  %v1210 = vld [vmem:[%s5 + $0xf8] sm:$0xff]
  %v1211 = vld [vmem:[%s7] sm:$0x1]
  %v1213 = vlaneseq
  %v1214 = vshrl.u32 %v1213, 7
  %v1215 = vsub.s32 0, %v1214
  %v1216 = vrot.slane %v1211, %v1215
  %1218 = vmatprep.subr.mxu0 0.0
  %1219 = vmatpush1.msra.mxu0 %v1179
  %1220 = vmatprep.subr.mxu0 0.0
  %1221 = vmatpush1.msra.mxu0 %v1180
  %1222 = vmatprep.subr.mxu0 0.0
  %1223 = vmatpush1.msra.mxu0 %v1181
  %1224 = vmatprep.subr.mxu0 0.0
  %1225 = vmatpush1.msra.mxu0 %v1182
  %1226 = vmatprep.subr.mxu0 0.0
  %1227 = vmatpush1.msra.mxu0 %v1183
  %1228 = vmatprep.subr.mxu0 0.0
  %1229 = vmatpush1.msra.mxu0 %v1184
  %1230 = vmatprep.subr.mxu0 0.0
  %1231 = vmatpush1.msra.mxu0 %v1185
  %1232 = vmatprep.subr.mxu0 0.0
  %1233 = vmatpush1.msra.mxu0 %v1186
  %1234 = vmatprep.subr.mxu0 0.0
  %1235 = vmatpush1.msra.mxu0 %v1187
  %1236 = vmatprep.subr.mxu0 0.0
  %1237 = vmatpush1.msra.mxu0 %v1188
  %1238 = vmatprep.subr.mxu0 0.0
  %1239 = vmatpush1.msra.mxu0 %v1189
  %1240 = vmatprep.subr.mxu0 0.0
  %1241 = vmatpush1.msra.mxu0 %v1190
  %1242 = vmatprep.subr.mxu0 0.0
  %1243 = vmatpush1.msra.mxu0 %v1191
  %1244 = vmatprep.subr.mxu0 0.0
  %1245 = vmatpush1.msra.mxu0 %v1192
  %1246 = vmatprep.subr.mxu0 0.0
  %1247 = vmatpush1.msra.mxu0 %v1193
  %1248 = vmatprep.subr.mxu0 0.0
  %1249 = vmatpush1.msra.mxu0 %v1194
  %1250 = vmatprep.subr.mxu0 0.0
  %1251 = vmatpush1.msra.mxu0 %v1195
  %1252 = vmatprep.subr.mxu0 0.0
  %1253 = vmatpush1.msra.mxu0 %v1196
  %1254 = vmatprep.subr.mxu0 0.0
  %1255 = vmatpush1.msra.mxu0 %v1197
  %1256 = vmatprep.subr.mxu0 0.0
  %1257 = vmatpush1.msra.mxu0 %v1198
  %1258 = vmatprep.subr.mxu0 0.0
  %1259 = vmatpush1.msra.mxu0 %v1199
  %1260 = vmatprep.subr.mxu0 0.0
  %1261 = vmatpush1.msra.mxu0 %v1200
  %1262 = vmatprep.subr.mxu0 0.0
  %1263 = vmatpush1.msra.mxu0 %v1201
  %1264 = vmatprep.subr.mxu0 0.0
  %1265 = vmatpush1.msra.mxu0 %v1202
  %1266 = vmatprep.subr.mxu0 0.0
  %1267 = vmatpush1.msra.mxu0 %v1203
  %1268 = vmatprep.subr.mxu0 0.0
  %1269 = vmatpush1.msra.mxu0 %v1204
  %1270 = vmatprep.subr.mxu0 0.0
  %1271 = vmatpush1.msra.mxu0 %v1205
  %1272 = vmatprep.subr.mxu0 0.0
  %1273 = vmatpush1.msra.mxu0 %v1206
  %1274 = vmatprep.subr.mxu0 0.0
  %1275 = vmatpush1.msra.mxu0 %v1207
  %1276 = vmatprep.subr.mxu0 0.0
  %1277 = vmatpush1.msra.mxu0 %v1208
  %1278 = vmatprep.subr.mxu0 0.0
  %1279 = vmatpush1.msra.mxu0 %v1209
  %1280 = vmatprep.subr.mxu0 0.0
  %1281 = vmatpush1.msra.mxu0 %v1210
  %1282 = vmatprep.mubr.f32.mxu0 %v1174
  %1283 = vmatmul.mubr.f32.gmra.mrb[0].mxu0 %v1173
  %v1284 = vpop.f32.mrb[0].mxu0
  %v1285 = vadd.f32 %v1216, %v1284
  %v1286 = vpop.f32.mrb[0].mxu0
  %1287 = vdwg.mxu0
  %1288 = vst [vmem:[%s8] sm:$0xff] %v1285
  %v1289 = vld [vmem:[%s6] sm:$0xff]
  %v1290 = vld [vmem:[%s6 + $0x8] sm:$0xff]
  %v1291 = vld [vmem:[%s6 + $0x10] sm:$0xff]
  %v1292 = vld [vmem:[%s6 + $0x18] sm:$0xff]
  %v1293 = vld [vmem:[%s6 + $0x20] sm:$0xff]
  %v1294 = vld [vmem:[%s6 + $0x28] sm:$0xff]
  %v1295 = vld [vmem:[%s6 + $0x30] sm:$0xff]
  %v1296 = vld [vmem:[%s6 + $0x38] sm:$0xff]
  %v1297 = vld [vmem:[%s6 + $0x40] sm:$0xff]
  %v1298 = vld [vmem:[%s6 + $0x48] sm:$0xff]
  %v1299 = vld [vmem:[%s6 + $0x50] sm:$0xff]
  %v1300 = vld [vmem:[%s6 + $0x58] sm:$0xff]
  %v1301 = vld [vmem:[%s6 + $0x60] sm:$0xff]
  %v1302 = vld [vmem:[%s6 + $0x68] sm:$0xff]
  %v1303 = vld [vmem:[%s6 + $0x70] sm:$0xff]
  %v1304 = vld [vmem:[%s6 + $0x78] sm:$0xff]
  %v1305 = vld [vmem:[%s6 + $0x80] sm:$0xff]
  %v1306 = vld [vmem:[%s6 + $0x88] sm:$0xff]
  %v1307 = vld [vmem:[%s6 + $0x90] sm:$0xff]
  %v1308 = vld [vmem:[%s6 + $0x98] sm:$0xff]
  %v1309 = vld [vmem:[%s6 + $0xa0] sm:$0xff]
  %v1310 = vld [vmem:[%s6 + $0xa8] sm:$0xff]
  %v1311 = vld [vmem:[%s6 + $0xb0] sm:$0xff]
  %v1312 = vld [vmem:[%s6 + $0xb8] sm:$0xff]
  %v1313 = vld [vmem:[%s6 + $0xc0] sm:$0xff]
  %v1314 = vld [vmem:[%s6 + $0xc8] sm:$0xff]
  %v1315 = vld [vmem:[%s6 + $0xd0] sm:$0xff]
  %v1316 = vld [vmem:[%s6 + $0xd8] sm:$0xff]
  %v1317 = vld [vmem:[%s6 + $0xe0] sm:$0xff]
  %v1318 = vld [vmem:[%s6 + $0xe8] sm:$0xff]
  %v1319 = vld [vmem:[%s6 + $0xf0] sm:$0xff]
  %v1320 = vld [vmem:[%s6 + $0xf8] sm:$0xff]
  %1321 = vmatprep.subr.mxu0 0.0
  %1322 = vmatpush1.msra.mxu0 %v1289
  %1323 = vmatprep.subr.mxu0 0.0
  %1324 = vmatpush1.msra.mxu0 %v1290
  %1325 = vmatprep.subr.mxu0 0.0
  %1326 = vmatpush1.msra.mxu0 %v1291
  %1327 = vmatprep.subr.mxu0 0.0
  %1328 = vmatpush1.msra.mxu0 %v1292
  %1329 = vmatprep.subr.mxu0 0.0
  %1330 = vmatpush1.msra.mxu0 %v1293
  %1331 = vmatprep.subr.mxu0 0.0
  %1332 = vmatpush1.msra.mxu0 %v1294
  %1333 = vmatprep.subr.mxu0 0.0
  %1334 = vmatpush1.msra.mxu0 %v1295
  %1335 = vmatprep.subr.mxu0 0.0
  %1336 = vmatpush1.msra.mxu0 %v1296
  %1337 = vmatprep.subr.mxu0 0.0
  %1338 = vmatpush1.msra.mxu0 %v1297
  %1339 = vmatprep.subr.mxu0 0.0
  %1340 = vmatpush1.msra.mxu0 %v1298
  %1341 = vmatprep.subr.mxu0 0.0
  %1342 = vmatpush1.msra.mxu0 %v1299
  %1343 = vmatprep.subr.mxu0 0.0
  %1344 = vmatpush1.msra.mxu0 %v1300
  %1345 = vmatprep.subr.mxu0 0.0
  %1346 = vmatpush1.msra.mxu0 %v1301
  %1347 = vmatprep.subr.mxu0 0.0
  %1348 = vmatpush1.msra.mxu0 %v1302
  %1349 = vmatprep.subr.mxu0 0.0
  %1350 = vmatpush1.msra.mxu0 %v1303
  %1351 = vmatprep.subr.mxu0 0.0
  %1352 = vmatpush1.msra.mxu0 %v1304
  %1353 = vmatprep.subr.mxu0 0.0
  %1354 = vmatpush1.msra.mxu0 %v1305
  %1355 = vmatprep.subr.mxu0 0.0
  %1356 = vmatpush1.msra.mxu0 %v1306
  %1357 = vmatprep.subr.mxu0 0.0
  %1358 = vmatpush1.msra.mxu0 %v1307
  %1359 = vmatprep.subr.mxu0 0.0
  %1360 = vmatpush1.msra.mxu0 %v1308
  %1361 = vmatprep.subr.mxu0 0.0
  %1362 = vmatpush1.msra.mxu0 %v1309
  %1363 = vmatprep.subr.mxu0 0.0
  %1364 = vmatpush1.msra.mxu0 %v1310
  %1365 = vmatprep.subr.mxu0 0.0
  %1366 = vmatpush1.msra.mxu0 %v1311
  %1367 = vmatprep.subr.mxu0 0.0
  %1368 = vmatpush1.msra.mxu0 %v1312
  %1369 = vmatprep.subr.mxu0 0.0
  %1370 = vmatpush1.msra.mxu0 %v1313
  %1371 = vmatprep.subr.mxu0 0.0
  %1372 = vmatpush1.msra.mxu0 %v1314
  %1373 = vmatprep.subr.mxu0 0.0
  %1374 = vmatpush1.msra.mxu0 %v1315
  %1375 = vmatprep.subr.mxu0 0.0
  %1376 = vmatpush1.msra.mxu0 %v1316
  %1377 = vmatprep.subr.mxu0 0.0
  %1378 = vmatpush1.msra.mxu0 %v1317
  %1379 = vmatprep.subr.mxu0 0.0
  %1380 = vmatpush1.msra.mxu0 %v1318
  %1381 = vmatprep.subr.mxu0 0.0
  %1382 = vmatpush1.msra.mxu0 %v1319
  %1383 = vmatprep.subr.mxu0 0.0
  %1384 = vmatpush1.msra.mxu0 %v1320
  %1385 = vmatprep.mubr.f32.mxu0 %v1178
  %1386 = vmatmul.mubr.f32.gmra.mrb[0].mxu0 %v1177
  %v1387 = vpop.f32.mrb[0].mxu0
  %v1388 = vadd.f32 0.0, %v1387
  %v1389 = vpop.f32.mrb[0].mxu0
  %1390 = vdwg.mxu0
  %1391 = vst [vmem:[%s9] sm:$0xff] %v1388
  // Predicated region
  $region34: #{center_radius_model.1} parent=0 // pred_check
    _
  $region35: #{center_radius_model.1} parent=0 // pred_check_branch
    %1393 = sbr.rel (0) target = $region37
  $region36: #{center_radius_model.1} parent=0 // pred_region
    _
  $region37: #{center_radius_model.1} parent=0 // pred_fallthru
    _
  // Predicated region
  $region38: #{center_radius_model.1} parent=0 // pred_check
    _
  $region39: #{center_radius_model.1} parent=0 // pred_check_branch
    %1395 = sbr.rel (0) target = $region41
  $region40: #{center_radius_model.1} parent=0 // pred_region
    _
  $region41: #{center_radius_model.1} parent=0 // pred_fallthru
    _
  // Predicated region
  $region42: #{center_radius_model.1} parent=0 // pred_check
    _
  $region43: #{center_radius_model.1} parent=0 // pred_check_branch
    %1397 = sbr.rel (0) target = $region45
  $region44: #{center_radius_model.1} parent=0 // pred_region
    _
  $region45: #{center_radius_model.1} parent=0 // pred_fallthru
    _
  // Predicated region
  $region46: #{center_radius_model.1} parent=0 // pred_check
    _
  $region47: #{center_radius_model.1} parent=0 // pred_check_branch
    %1399 = sbr.rel (0) target = $region49
  $region48: #{center_radius_model.1} parent=0 // pred_region
    _
  $region49: #{center_radius_model.1} parent=0 // pred_fallthru
    _

</llo_original>
